<compile_context>
chip_gen: v7x
topology: tpu7x:2x2x1
jax: 0.10.0
libtpu: 0.0.40
codegen_flags: <defaults>
</compile_context>

<pallas_src>
import math
import functools

import jax
import jax.numpy as jnp
from jax.experimental import pallas as pl
from jax.experimental.pallas import tpu as pltpu


def _layer_norm(x, gamma, beta, eps=1e-5):
    # Single-pass LayerNorm: one reduction sweep (E[x], E[x^2]) instead of two.
    mu = jnp.mean(x, axis=-1, keepdims=True)
    ms = jnp.mean(x * x, axis=-1, keepdims=True)
    inv = jax.lax.rsqrt(ms - mu * mu + eps)
    return (x - mu) * inv * gamma + beta


def encoder_layer_kernel(n_heads, ff_chunk,
                         x_q_ref, x_kv_ref,
                         wq_ref, wk_ref, wv_ref, wo_ref,
                         bq_ref, bk_ref, bv_ref, bo_ref,
                         gamma_ref, beta_ref,
                         w1_ref, b1_ref, w2_ref, b2_ref,
                         out_ref,
                         q_scr, k_scr, v_scr, attn_scr):
    qi = pl.program_id(1)
    tq, D = q_scr.shape
    S = v_scr.shape[0]
    dh = D // n_heads
    scale = 1.0 / math.sqrt(dh)

    # ---- K/V projections: query-tile invariant, computed once per batch block
    # (qi == 0) into bf16 VMEM scratch that persists across grid iterations.
    @pl.when(qi == 0)
    def _():
        xkv = x_kv_ref[0].astype(jnp.bfloat16)                 # (S, D) bf16
        k = jnp.dot(xkv, wk_ref[...], preferred_element_type=jnp.float32) + bk_ref[...]
        v = jnp.dot(xkv, wv_ref[...], preferred_element_type=jnp.float32) + bv_ref[...]
        k_scr[...] = k.astype(jnp.bfloat16)
        v_scr[...] = v.astype(jnp.bfloat16)

    # ---- Q projection for this query tile; 1/sqrt(dh) folded into Q once ----
    x = x_q_ref[0].astype(jnp.float32)                          # (tq, D) fp32 residual
    q = jnp.dot(x.astype(jnp.bfloat16), wq_ref[...],
                preferred_element_type=jnp.float32) + bq_ref[...]
    q_scr[...] = (q * scale).astype(jnp.bfloat16)

    # ---- per-head attention; heads sliced from bf16 scratch via ref indexing,
    # head outputs written straight into bf16 scratch (no concat, no fp32
    # (S,D) values live across the unrolled loop).
    for h in range(n_heads):                                    # static unroll, n_heads small
        lo, hi = h * dh, (h + 1) * dh
        # scores = qh @ kh^T without materialising a transpose (contract last dims)
        s = jax.lax.dot_general(q_scr[:, lo:hi], k_scr[:, lo:hi],
                                (((1,), (1,)), ((), ())),
                                preferred_element_type=jnp.float32)   # (tq, S) fp32
        s = s - jnp.max(s, axis=-1, keepdims=True)
        p = jnp.exp(s)                                          # fp32 exp (v5e-safe)
        inv_l = pl.reciprocal(jnp.sum(p, axis=-1, keepdims=True), approx=True)
        # normalization folded AFTER the PV matmul: (tq,dh) multiply, not (tq,S)
        oh = jnp.dot(p.astype(jnp.bfloat16), v_scr[:, lo:hi],
                     preferred_element_type=jnp.float32)        # (tq, dh) fp32
        attn_scr[:, lo:hi] = (oh * inv_l).astype(jnp.bfloat16)

    # ---- output projection (single wide matmul) + LayerNorm + residual -----
    attn = jnp.dot(attn_scr[...], wo_ref[...],
                   preferred_element_type=jnp.float32) + bo_ref[...]
    gamma = gamma_ref[...]
    beta = beta_ref[...]
    out1 = _layer_norm(attn, gamma, beta) + x                   # (tq, D) fp32

    # ---- FeedForward (Linear -> ReLU -> Linear), chunked over the hidden dim
    # so no fp32 (tq, H) intermediate is ever materialised; dropout = identity.
    out1_b = out1.astype(jnp.bfloat16)
    H = w1_ref.shape[1]
    ff = b2_ref[...]                                            # (1, D), broadcasts
    for c0 in range(0, H, ff_chunk):
        cs = min(ff_chunk, H - c0)
        h1 = jnp.dot(out1_b, w1_ref[:, c0:c0 + cs],
                     preferred_element_type=jnp.float32) + b1_ref[:, c0:c0 + cs]
        h1 = jnp.maximum(h1, 0.0)
        ff = ff + jnp.dot(h1.astype(jnp.bfloat16), w2_ref[c0:c0 + cs, :],
                          preferred_element_type=jnp.float32)

    # ---- second LayerNorm (shared params, as in the PyTorch module) + residual
    out_ref[0] = (_layer_norm(ff, gamma, beta) + ff).astype(out_ref.dtype)


def _vmem_capacity_bytes():
    try:
        return int(pltpu.get_tpu_info().vmem_capacity_bytes)
    except Exception:
        return 128 * 1024 * 1024   # v5e/v6e size; conservative default


def encoder_layer(x, params, n_heads):
    """x: (B, S, D) float32. params: dict of fp32 weights (see init_params)."""
    B, S, D = x.shape
    assert D % n_heads == 0
    H = params["w1"].shape[1]

    # Query-tile size: full sequence at small S, 256-aligned tiles at large S
    # (256-deep MXU on v6e/v7x; keeps the (tq, S) score block bounded).
    tq = S
    for cand in (256, 128):
        if S > cand and S % cand == 0:
            tq = cand
            break
    nq = S // tq
    ff_chunk = min(H, 2048)

    bf16 = jnp.bfloat16
    wq = params["wq"].astype(bf16)
    wk = params["wk"].astype(bf16)
    wv = params["wv"].astype(bf16)
    wo = params["wo"].astype(bf16)
    w1 = params["w1"].astype(bf16)
    w2 = params["w2"].astype(bf16)

    inv2d = lambda shape: pl.BlockSpec(shape, lambda b, qi: (0, 0))

    in_specs = [
        pl.BlockSpec((1, tq, D), lambda b, qi: (b, qi, 0)),               # x (query tile)
        pl.BlockSpec((1, S, D), lambda b, qi: (b, 0, 0)),                 # x (full, for K/V)
        inv2d((D, D)), inv2d((D, D)), inv2d((D, D)), inv2d((D, D)),       # Wq Wk Wv Wo
        inv2d((1, D)), inv2d((1, D)), inv2d((1, D)), inv2d((1, D)),       # bq bk bv bo
        inv2d((1, D)), inv2d((1, D)),                                     # gamma beta
        inv2d((D, H)), inv2d((1, H)), inv2d((H, D)), inv2d((1, D)),       # W1 b1 W2 b2
    ]

    kernel = functools.partial(encoder_layer_kernel, n_heads, ff_chunk)

    # ---- generation-aware VMEM budget from the real resident set -----------
    f32b, bf16b = 4, 2
    weight_bytes = bf16b * (4 * D * D + 2 * D * H)
    bias_bytes = f32b * (7 * D + H)
    resident = (2 * (weight_bytes + bias_bytes)          # default double-buffering
                + 2 * f32b * S * D                       # x_kv block (double-buffered)
                + 4 * f32b * tq * D                      # x_q + out blocks
                + bf16b * (2 * tq * D + 2 * S * D)       # q/attn + k/v scratch
                + f32b * (tq * S + 6 * tq * D + tq * ff_chunk))   # fp32 temporaries
    cap = _vmem_capacity_bytes()
    vmem_bytes = min(int(cap * 0.85),                    # ~109 MiB v5e/v6e, ~54 MiB v7x
                     max(32 * 1024 * 1024, resident + (8 << 20)))

    flops = B * (8 * S * D * D + 4 * S * S * D + 4 * S * D * H)
    transcendentals = B * (n_heads * S * S + 4 * S)
    bytes_accessed = 3 * B * S * D * 4 + weight_bytes + bias_bytes

    return pl.pallas_call(
        kernel,
        out_shape=jax.ShapeDtypeStruct((B, S, D), x.dtype),
        grid_spec=pltpu.PrefetchScalarGridSpec(
            num_scalar_prefetch=0,
            grid=(B, nq),
            in_specs=in_specs,
            out_specs=pl.BlockSpec((1, tq, D), lambda b, qi: (b, qi, 0)),
            scratch_shapes=[pltpu.VMEM((tq, D), jnp.bfloat16),   # Q
                            pltpu.VMEM((S, D), jnp.bfloat16),    # K
                            pltpu.VMEM((S, D), jnp.bfloat16),    # V
                            pltpu.VMEM((tq, D), jnp.bfloat16)]), # head outputs
        compiler_params=pltpu.CompilerParams(
            dimension_semantics=("parallel", "arbitrary"),
            vmem_limit_bytes=int(vmem_bytes)),
        cost_estimate=pl.CostEstimate(
            flops=int(flops),
            transcendentals=int(transcendentals),
            bytes_accessed=int(bytes_accessed)),
    )(x, x,
      wq, wk, wv, wo,
      params["bq"], params["bk"], params["bv"], params["bo"],
      params["gamma"], params["beta"],
      w1, params["b1"], w2, params["b2"])


def init_params(key, d_model, ff_hidden):
    ks = jax.random.split(key, 8)
    s = 1.0 / math.sqrt(d_model)
    return {
        "wq": jax.random.normal(ks[0], (d_model, d_model), jnp.float32) * s,
        "wk": jax.random.normal(ks[1], (d_model, d_model), jnp.float32) * s,
        "wv": jax.random.normal(ks[2], (d_model, d_model), jnp.float32) * s,
        "wo": jax.random.normal(ks[3], (d_model, d_model), jnp.float32) * s,
        "bq": jnp.zeros((1, d_model), jnp.float32),
        "bk": jnp.zeros((1, d_model), jnp.float32),
        "bv": jnp.zeros((1, d_model), jnp.float32),
        "bo": jnp.zeros((1, d_model), jnp.float32),
        "gamma": jnp.ones((1, d_model), jnp.float32),
        "beta": jnp.zeros((1, d_model), jnp.float32),
        "w1": jax.random.normal(ks[4], (d_model, ff_hidden), jnp.float32) * s,
        "b1": jnp.zeros((1, ff_hidden), jnp.float32),
        "w2": jax.random.normal(ks[5], (ff_hidden, d_model), jnp.float32)
              * (1.0 / math.sqrt(ff_hidden)),
        "b2": jnp.zeros((1, d_model), jnp.float32),
    }


def encoder_layer_ref(x, p, n_heads):
    """Pure-JAX reference (same math) for a sanity check."""
    B, S, D = x.shape
    dh = D // n_heads

    def ln(z):
        mu = jnp.mean(z, -1, keepdims=True)
        var = jnp.mean((z - mu) ** 2, -1, keepdims=True)
        return (z - mu) / jnp.sqrt(var + 1e-5) * p["gamma"] + p["beta"]

    q = x @ p["wq"] + p["bq"]
    k = x @ p["wk"] + p["bk"]
    v = x @ p["wv"] + p["bv"]
    q = q.reshape(B, S, n_heads, dh).transpose(0, 2, 1, 3)
    k = k.reshape(B, S, n_heads, dh).transpose(0, 2, 1, 3)
    v = v.reshape(B, S, n_heads, dh).transpose(0, 2, 1, 3)
    s = jnp.einsum("bhqd,bhkd->bhqk", q, k) / math.sqrt(dh)
    pattn = jax.nn.softmax(s, axis=-1)
    attn = jnp.einsum("bhqk,bhkd->bhqd", pattn, v).transpose(0, 2, 1, 3).reshape(B, S, D)
    attn = attn @ p["wo"] + p["bo"]
    out1 = ln(attn) + x
    ff = jnp.maximum(out1 @ p["w1"] + p["b1"], 0.0) @ p["w2"] + p["b2"]
    return ln(ff) + ff


if __name__ == "__main__":
    # NOTE: demo shapes only exercise correctness; benchmark at 128/256-aligned
    # S, D, H to see any of the kernel's performance structure.
    B, S, D = 2, 8, 32
    n_heads = 4
    ff_hidden = 64

    key = jax.random.PRNGKey(0)
    kx, kp = jax.random.split(key)
    x = jax.random.normal(kx, (B, S, D), jnp.float32)
    params = init_params(kp, D, ff_hidden)

    out = encoder_layer(x, params, n_heads)
    out = jax.block_until_ready(out)

    # Reference uses bf16-rounded matmul weights (the kernel feeds bf16 to the
    # MXU), so the comparison isolates structural errors from quantization.
    p_ref = dict(params)
    for name in ("wq", "wk", "wv", "wo", "w1", "w2"):
        p_ref[name] = params[name].astype(jnp.bfloat16).astype(jnp.float32)
    ref = encoder_layer_ref(x, p_ref, n_heads)

    assert out.shape == (B, S, D)
    assert jnp.allclose(out, ref, atol=1e-1, rtol=1e-1), \
        float(jnp.max(jnp.abs(out - ref)))

    print("KERNEL_OK")
</pallas_src>

<mosaic_0001>
module attributes {stable_mosaic.version = 11 : i64} {
  func.func @encoder_layer_kernel(%arg0: i32, %arg1: i32, %arg2: memref<1x8x32xf32, #tpu.memory_space<vmem>>, %arg3: memref<1x8x32xf32, #tpu.memory_space<vmem>>, %arg4: memref<32x32xbf16, #tpu.memory_space<vmem>>, %arg5: memref<32x32xbf16, #tpu.memory_space<vmem>>, %arg6: memref<32x32xbf16, #tpu.memory_space<vmem>>, %arg7: memref<32x32xbf16, #tpu.memory_space<vmem>>, %arg8: memref<1x32xf32, #tpu.memory_space<vmem>>, %arg9: memref<1x32xf32, #tpu.memory_space<vmem>>, %arg10: memref<1x32xf32, #tpu.memory_space<vmem>>, %arg11: memref<1x32xf32, #tpu.memory_space<vmem>>, %arg12: memref<1x32xf32, #tpu.memory_space<vmem>>, %arg13: memref<1x32xf32, #tpu.memory_space<vmem>>, %arg14: memref<32x64xbf16, #tpu.memory_space<vmem>>, %arg15: memref<1x64xf32, #tpu.memory_space<vmem>>, %arg16: memref<64x32xbf16, #tpu.memory_space<vmem>>, %arg17: memref<1x32xf32, #tpu.memory_space<vmem>>, %arg18: memref<1x8x32xf32, #tpu.memory_space<vmem>>, %arg19: memref<8x32xbf16, #tpu.memory_space<vmem>>, %arg20: memref<8x32xbf16, #tpu.memory_space<vmem>>, %arg21: memref<8x32xbf16, #tpu.memory_space<vmem>>, %arg22: memref<8x32xbf16, #tpu.memory_space<vmem>>) attributes {dimension_semantics = [#tpu.dimension_semantics<parallel>, #tpu.dimension_semantics<arbitrary>], iteration_bounds = array<i64: 2, 1>, scalar_prefetch = 0 : i64, scratch_operands = 4 : i64, tpu.core_type = #tpu.core_type<tc>, window_params = [{transform_indices = @transform_0, window_bounds = array<i64: 1, 8, 32>}, {transform_indices = @transform_1, window_bounds = array<i64: 1, 8, 32>}, {pipeline_mode = #tpu.pipeline_mode<synchronous>, transform_indices = @transform_2, window_bounds = array<i64: 32, 32>}, {pipeline_mode = #tpu.pipeline_mode<synchronous>, transform_indices = @transform_3, window_bounds = array<i64: 32, 32>}, {pipeline_mode = #tpu.pipeline_mode<synchronous>, transform_indices = @transform_4, window_bounds = array<i64: 32, 32>}, {pipeline_mode = #tpu.pipeline_mode<synchronous>, transform_indices = @transform_5, window_bounds = array<i64: 32, 32>}, {pipeline_mode = #tpu.pipeline_mode<synchronous>, transform_indices = @transform_6, window_bounds = array<i64: 1, 32>}, {pipeline_mode = #tpu.pipeline_mode<synchronous>, transform_indices = @transform_7, window_bounds = array<i64: 1, 32>}, {pipeline_mode = #tpu.pipeline_mode<synchronous>, transform_indices = @transform_8, window_bounds = array<i64: 1, 32>}, {pipeline_mode = #tpu.pipeline_mode<synchronous>, transform_indices = @transform_9, window_bounds = array<i64: 1, 32>}, {pipeline_mode = #tpu.pipeline_mode<synchronous>, transform_indices = @transform_10, window_bounds = array<i64: 1, 32>}, {pipeline_mode = #tpu.pipeline_mode<synchronous>, transform_indices = @transform_11, window_bounds = array<i64: 1, 32>}, {pipeline_mode = #tpu.pipeline_mode<synchronous>, transform_indices = @transform_12, window_bounds = array<i64: 32, 64>}, {pipeline_mode = #tpu.pipeline_mode<synchronous>, transform_indices = @transform_13, window_bounds = array<i64: 1, 64>}, {pipeline_mode = #tpu.pipeline_mode<synchronous>, transform_indices = @transform_14, window_bounds = array<i64: 64, 32>}, {pipeline_mode = #tpu.pipeline_mode<synchronous>, transform_indices = @transform_15, window_bounds = array<i64: 1, 32>}, {transform_indices = @transform_16, window_bounds = array<i64: 1, 8, 32>}]} {
    %c0_i32 = arith.constant 0 : i32
    %0 = arith.cmpi eq, %arg1, %c0_i32 : i32
    %1 = arith.extui %0 : i1 to i32
    %c0_i32_0 = arith.constant 0 : i32
    %2 = arith.cmpi ne, %1, %c0_i32_0 : i32
    scf.if %2 {
      %c0_90 = arith.constant 0 : index
      %c0_91 = arith.constant 0 : index
      %c0_92 = arith.constant 0 : index
      %158 = vector.load %arg3[%c0_90, %c0_91, %c0_92] : memref<1x8x32xf32, #tpu.memory_space<vmem>>, vector<1x8x32xf32>
      %159 = vector.shape_cast %158 : vector<1x8x32xf32> to vector<8x32xf32>
      %160 = arith.truncf %159 : vector<8x32xf32> to vector<8x32xbf16>
      %c0_93 = arith.constant 0 : index
      %c0_94 = arith.constant 0 : index
      %161 = vector.load %arg5[%c0_93, %c0_94] : memref<32x32xbf16, #tpu.memory_space<vmem>>, vector<32x32xbf16>
      %cst_95 = arith.constant dense<0.000000e+00> : vector<8x32xf32>
      %162 = tpu.matmul %160, %161, %cst_95 {dimension_numbers = #tpu.dot_dimension_numbers<[1], [0], [0], [1], [0, 0, 1, 1], [], []>} : vector<8x32xbf16>, vector<32x32xbf16>, vector<8x32xf32> -> vector<8x32xf32>
      %c0_96 = arith.constant 0 : index
      %c0_97 = arith.constant 0 : index
      %163 = vector.load %arg9[%c0_96, %c0_97] : memref<1x32xf32, #tpu.memory_space<vmem>>, vector<1x32xf32>
      %164 = vector.broadcast %163 : vector<1x32xf32> to vector<8x32xf32>
      %165 = arith.addf %162, %164 : vector<8x32xf32>
      %c0_98 = arith.constant 0 : index
      %c0_99 = arith.constant 0 : index
      %166 = vector.load %arg6[%c0_98, %c0_99] : memref<32x32xbf16, #tpu.memory_space<vmem>>, vector<32x32xbf16>
      %cst_100 = arith.constant dense<0.000000e+00> : vector<8x32xf32>
      %167 = tpu.matmul %160, %166, %cst_100 {dimension_numbers = #tpu.dot_dimension_numbers<[1], [0], [0], [1], [0, 0, 1, 1], [], []>} : vector<8x32xbf16>, vector<32x32xbf16>, vector<8x32xf32> -> vector<8x32xf32>
      %c0_101 = arith.constant 0 : index
      %c0_102 = arith.constant 0 : index
      %168 = vector.load %arg10[%c0_101, %c0_102] : memref<1x32xf32, #tpu.memory_space<vmem>>, vector<1x32xf32>
      %169 = vector.broadcast %168 : vector<1x32xf32> to vector<8x32xf32>
      %170 = arith.addf %167, %169 : vector<8x32xf32>
      %171 = arith.truncf %165 : vector<8x32xf32> to vector<8x32xbf16>
      %c0_103 = arith.constant 0 : index
      %c0_104 = arith.constant 0 : index
      %172 = vector.load %arg20[%c0_103, %c0_104] : memref<8x32xbf16, #tpu.memory_space<vmem>>, vector<8x32xbf16>
      tpu.vector_store %arg20[%c0_103, %c0_104], %171 {strides = array<i32>} : memref<8x32xbf16, #tpu.memory_space<vmem>>, vector<8x32xbf16>,
      %173 = arith.truncf %170 : vector<8x32xf32> to vector<8x32xbf16>
      %c0_105 = arith.constant 0 : index
      %c0_106 = arith.constant 0 : index
      %174 = vector.load %arg21[%c0_105, %c0_106] : memref<8x32xbf16, #tpu.memory_space<vmem>>, vector<8x32xbf16>
      tpu.vector_store %arg21[%c0_105, %c0_106], %173 {strides = array<i32>} : memref<8x32xbf16, #tpu.memory_space<vmem>>, vector<8x32xbf16>,
    } else {
    }
    %c0 = arith.constant 0 : index
    %c0_1 = arith.constant 0 : index
    %c0_2 = arith.constant 0 : index
    %3 = vector.load %arg2[%c0, %c0_1, %c0_2] : memref<1x8x32xf32, #tpu.memory_space<vmem>>, vector<1x8x32xf32>
    %4 = vector.shape_cast %3 : vector<1x8x32xf32> to vector<8x32xf32>
    %5 = arith.truncf %4 : vector<8x32xf32> to vector<8x32xbf16>
    %c0_3 = arith.constant 0 : index
    %c0_4 = arith.constant 0 : index
    %6 = vector.load %arg4[%c0_3, %c0_4] : memref<32x32xbf16, #tpu.memory_space<vmem>>, vector<32x32xbf16>
    %cst = arith.constant dense<0.000000e+00> : vector<8x32xf32>
    %7 = tpu.matmul %5, %6, %cst {dimension_numbers = #tpu.dot_dimension_numbers<[1], [0], [0], [1], [0, 0, 1, 1], [], []>} : vector<8x32xbf16>, vector<32x32xbf16>, vector<8x32xf32> -> vector<8x32xf32>
    %c0_5 = arith.constant 0 : index
    %c0_6 = arith.constant 0 : index
    %8 = vector.load %arg8[%c0_5, %c0_6] : memref<1x32xf32, #tpu.memory_space<vmem>>, vector<1x32xf32>
    %9 = vector.broadcast %8 : vector<1x32xf32> to vector<8x32xf32>
    %10 = arith.addf %7, %9 : vector<8x32xf32>
    %cst_7 = arith.constant 0.353553385 : f32
    %11 = vector.broadcast %cst_7 : f32 to vector<8x32xf32>
    %12 = arith.mulf %10, %11 : vector<8x32xf32>
    %13 = arith.truncf %12 : vector<8x32xf32> to vector<8x32xbf16>
    %c0_8 = arith.constant 0 : index
    %c0_9 = arith.constant 0 : index
    %14 = vector.load %arg19[%c0_8, %c0_9] : memref<8x32xbf16, #tpu.memory_space<vmem>>, vector<8x32xbf16>
    tpu.vector_store %arg19[%c0_8, %c0_9], %13 {strides = array<i32>} : memref<8x32xbf16, #tpu.memory_space<vmem>>, vector<8x32xbf16>,
    %c0_10 = arith.constant 0 : index
    %c0_11 = arith.constant 0 : index
    %15 = vector.load %arg19[%c0_10, %c0_11] : memref<8x32xbf16, #tpu.memory_space<vmem>>, vector<8x8xbf16>
    %c0_12 = arith.constant 0 : index
    %c0_13 = arith.constant 0 : index
    %16 = vector.load %arg20[%c0_12, %c0_13] : memref<8x32xbf16, #tpu.memory_space<vmem>>, vector<8x8xbf16>
    %cst_14 = arith.constant dense<0.000000e+00> : vector<8x8xf32>
    %17 = tpu.matmul %15, %16, %cst_14 {dimension_numbers = #tpu.dot_dimension_numbers<[1], [1], [0], [0], [0, 0, 1, 0], [], []>} : vector<8x8xbf16>, vector<8x8xbf16>, vector<8x8xf32> -> vector<8x8xf32>
    %cst_15 = arith.constant dense<0xFF800000> : vector<8xf32>
    %18 = vector.multi_reduction <maximumf>, %17, %cst_15 [1] : vector<8x8xf32> to vector<8xf32>
    %19 = vector.shape_cast %18 : vector<8xf32> to vector<8x1xf32>
    %20 = vector.broadcast %19 : vector<8x1xf32> to vector<8x8xf32>
    %21 = arith.subf %17, %20 : vector<8x8xf32>
    %22 = math.exp %21 : vector<8x8xf32>
    %cst_16 = arith.constant dense<0.000000e+00> : vector<8xf32>
    %23 = vector.multi_reduction <add>, %22, %cst_16 [1] : vector<8x8xf32> to vector<8xf32>
    %24 = vector.shape_cast %23 : vector<8xf32> to vector<8x1xf32>
    %25 = tpu.reciprocal %24 {approx = true} : vector<8x1xf32> -> vector<8x1xf32>
    %26 = arith.truncf %22 : vector<8x8xf32> to vector<8x8xbf16>
    %c0_17 = arith.constant 0 : index
    %c0_18 = arith.constant 0 : index
    %27 = vector.load %arg21[%c0_17, %c0_18] : memref<8x32xbf16, #tpu.memory_space<vmem>>, vector<8x8xbf16>
    %cst_19 = arith.constant dense<0.000000e+00> : vector<8x8xf32>
    %28 = tpu.matmul %26, %27, %cst_19 {dimension_numbers = #tpu.dot_dimension_numbers<[1], [0], [0], [1], [0, 0, 1, 1], [], []>} : vector<8x8xbf16>, vector<8x8xbf16>, vector<8x8xf32> -> vector<8x8xf32>
    %29 = vector.broadcast %25 : vector<8x1xf32> to vector<8x8xf32>
    %30 = arith.mulf %28, %29 : vector<8x8xf32>
    %31 = arith.truncf %30 : vector<8x8xf32> to vector<8x8xbf16>
    %c0_20 = arith.constant 0 : index
    %c0_21 = arith.constant 0 : index
    %32 = vector.load %arg22[%c0_20, %c0_21] : memref<8x32xbf16, #tpu.memory_space<vmem>>, vector<8x8xbf16>
    tpu.vector_store %arg22[%c0_20, %c0_21], %31 {strides = array<i32>} : memref<8x32xbf16, #tpu.memory_space<vmem>>, vector<8x8xbf16>,
    %c0_22 = arith.constant 0 : index
    %c8 = arith.constant 8 : index
    %33 = vector.load %arg19[%c0_22, %c8] : memref<8x32xbf16, #tpu.memory_space<vmem>>, vector<8x8xbf16>
    %c0_23 = arith.constant 0 : index
    %c8_24 = arith.constant 8 : index
    %34 = vector.load %arg20[%c0_23, %c8_24] : memref<8x32xbf16, #tpu.memory_space<vmem>>, vector<8x8xbf16>
    %cst_25 = arith.constant dense<0.000000e+00> : vector<8x8xf32>
    %35 = tpu.matmul %33, %34, %cst_25 {dimension_numbers = #tpu.dot_dimension_numbers<[1], [1], [0], [0], [0, 0, 1, 0], [], []>} : vector<8x8xbf16>, vector<8x8xbf16>, vector<8x8xf32> -> vector<8x8xf32>
    %cst_26 = arith.constant dense<0xFF800000> : vector<8xf32>
    %36 = vector.multi_reduction <maximumf>, %35, %cst_26 [1] : vector<8x8xf32> to vector<8xf32>
    %37 = vector.shape_cast %36 : vector<8xf32> to vector<8x1xf32>
    %38 = vector.broadcast %37 : vector<8x1xf32> to vector<8x8xf32>
    %39 = arith.subf %35, %38 : vector<8x8xf32>
    %40 = math.exp %39 : vector<8x8xf32>
    %cst_27 = arith.constant dense<0.000000e+00> : vector<8xf32>
    %41 = vector.multi_reduction <add>, %40, %cst_27 [1] : vector<8x8xf32> to vector<8xf32>
    %42 = vector.shape_cast %41 : vector<8xf32> to vector<8x1xf32>
    %43 = tpu.reciprocal %42 {approx = true} : vector<8x1xf32> -> vector<8x1xf32>
    %44 = arith.truncf %40 : vector<8x8xf32> to vector<8x8xbf16>
    %c0_28 = arith.constant 0 : index
    %c8_29 = arith.constant 8 : index
    %45 = vector.load %arg21[%c0_28, %c8_29] : memref<8x32xbf16, #tpu.memory_space<vmem>>, vector<8x8xbf16>
    %cst_30 = arith.constant dense<0.000000e+00> : vector<8x8xf32>
    %46 = tpu.matmul %44, %45, %cst_30 {dimension_numbers = #tpu.dot_dimension_numbers<[1], [0], [0], [1], [0, 0, 1, 1], [], []>} : vector<8x8xbf16>, vector<8x8xbf16>, vector<8x8xf32> -> vector<8x8xf32>
    %47 = vector.broadcast %43 : vector<8x1xf32> to vector<8x8xf32>
    %48 = arith.mulf %46, %47 : vector<8x8xf32>
    %49 = arith.truncf %48 : vector<8x8xf32> to vector<8x8xbf16>
    %c0_31 = arith.constant 0 : index
    %c8_32 = arith.constant 8 : index
    %50 = vector.load %arg22[%c0_31, %c8_32] : memref<8x32xbf16, #tpu.memory_space<vmem>>, vector<8x8xbf16>
    tpu.vector_store %arg22[%c0_31, %c8_32], %49 {strides = array<i32>} : memref<8x32xbf16, #tpu.memory_space<vmem>>, vector<8x8xbf16>,
    %c0_33 = arith.constant 0 : index
    %c16 = arith.constant 16 : index
    %51 = vector.load %arg19[%c0_33, %c16] : memref<8x32xbf16, #tpu.memory_space<vmem>>, vector<8x8xbf16>
    %c0_34 = arith.constant 0 : index
    %c16_35 = arith.constant 16 : index
    %52 = vector.load %arg20[%c0_34, %c16_35] : memref<8x32xbf16, #tpu.memory_space<vmem>>, vector<8x8xbf16>
    %cst_36 = arith.constant dense<0.000000e+00> : vector<8x8xf32>
    %53 = tpu.matmul %51, %52, %cst_36 {dimension_numbers = #tpu.dot_dimension_numbers<[1], [1], [0], [0], [0, 0, 1, 0], [], []>} : vector<8x8xbf16>, vector<8x8xbf16>, vector<8x8xf32> -> vector<8x8xf32>
    %cst_37 = arith.constant dense<0xFF800000> : vector<8xf32>
    %54 = vector.multi_reduction <maximumf>, %53, %cst_37 [1] : vector<8x8xf32> to vector<8xf32>
    %55 = vector.shape_cast %54 : vector<8xf32> to vector<8x1xf32>
    %56 = vector.broadcast %55 : vector<8x1xf32> to vector<8x8xf32>
    %57 = arith.subf %53, %56 : vector<8x8xf32>
    %58 = math.exp %57 : vector<8x8xf32>
    %cst_38 = arith.constant dense<0.000000e+00> : vector<8xf32>
    %59 = vector.multi_reduction <add>, %58, %cst_38 [1] : vector<8x8xf32> to vector<8xf32>
    %60 = vector.shape_cast %59 : vector<8xf32> to vector<8x1xf32>
    %61 = tpu.reciprocal %60 {approx = true} : vector<8x1xf32> -> vector<8x1xf32>
    %62 = arith.truncf %58 : vector<8x8xf32> to vector<8x8xbf16>
    %c0_39 = arith.constant 0 : index
    %c16_40 = arith.constant 16 : index
    %63 = vector.load %arg21[%c0_39, %c16_40] : memref<8x32xbf16, #tpu.memory_space<vmem>>, vector<8x8xbf16>
    %cst_41 = arith.constant dense<0.000000e+00> : vector<8x8xf32>
    %64 = tpu.matmul %62, %63, %cst_41 {dimension_numbers = #tpu.dot_dimension_numbers<[1], [0], [0], [1], [0, 0, 1, 1], [], []>} : vector<8x8xbf16>, vector<8x8xbf16>, vector<8x8xf32> -> vector<8x8xf32>
    %65 = vector.broadcast %61 : vector<8x1xf32> to vector<8x8xf32>
    %66 = arith.mulf %64, %65 : vector<8x8xf32>
    %67 = arith.truncf %66 : vector<8x8xf32> to vector<8x8xbf16>
    %c0_42 = arith.constant 0 : index
    %c16_43 = arith.constant 16 : index
    %68 = vector.load %arg22[%c0_42, %c16_43] : memref<8x32xbf16, #tpu.memory_space<vmem>>, vector<8x8xbf16>
    tpu.vector_store %arg22[%c0_42, %c16_43], %67 {strides = array<i32>} : memref<8x32xbf16, #tpu.memory_space<vmem>>, vector<8x8xbf16>,
    %c0_44 = arith.constant 0 : index
    %c24 = arith.constant 24 : index
    %69 = vector.load %arg19[%c0_44, %c24] : memref<8x32xbf16, #tpu.memory_space<vmem>>, vector<8x8xbf16>
    %c0_45 = arith.constant 0 : index
    %c24_46 = arith.constant 24 : index
    %70 = vector.load %arg20[%c0_45, %c24_46] : memref<8x32xbf16, #tpu.memory_space<vmem>>, vector<8x8xbf16>
    %cst_47 = arith.constant dense<0.000000e+00> : vector<8x8xf32>
    %71 = tpu.matmul %69, %70, %cst_47 {dimension_numbers = #tpu.dot_dimension_numbers<[1], [1], [0], [0], [0, 0, 1, 0], [], []>} : vector<8x8xbf16>, vector<8x8xbf16>, vector<8x8xf32> -> vector<8x8xf32>
    %cst_48 = arith.constant dense<0xFF800000> : vector<8xf32>
    %72 = vector.multi_reduction <maximumf>, %71, %cst_48 [1] : vector<8x8xf32> to vector<8xf32>
    %73 = vector.shape_cast %72 : vector<8xf32> to vector<8x1xf32>
    %74 = vector.broadcast %73 : vector<8x1xf32> to vector<8x8xf32>
    %75 = arith.subf %71, %74 : vector<8x8xf32>
    %76 = math.exp %75 : vector<8x8xf32>
    %cst_49 = arith.constant dense<0.000000e+00> : vector<8xf32>
    %77 = vector.multi_reduction <add>, %76, %cst_49 [1] : vector<8x8xf32> to vector<8xf32>
    %78 = vector.shape_cast %77 : vector<8xf32> to vector<8x1xf32>
    %79 = tpu.reciprocal %78 {approx = true} : vector<8x1xf32> -> vector<8x1xf32>
    %80 = arith.truncf %76 : vector<8x8xf32> to vector<8x8xbf16>
    %c0_50 = arith.constant 0 : index
    %c24_51 = arith.constant 24 : index
    %81 = vector.load %arg21[%c0_50, %c24_51] : memref<8x32xbf16, #tpu.memory_space<vmem>>, vector<8x8xbf16>
    %cst_52 = arith.constant dense<0.000000e+00> : vector<8x8xf32>
    %82 = tpu.matmul %80, %81, %cst_52 {dimension_numbers = #tpu.dot_dimension_numbers<[1], [0], [0], [1], [0, 0, 1, 1], [], []>} : vector<8x8xbf16>, vector<8x8xbf16>, vector<8x8xf32> -> vector<8x8xf32>
    %83 = vector.broadcast %79 : vector<8x1xf32> to vector<8x8xf32>
    %84 = arith.mulf %82, %83 : vector<8x8xf32>
    %85 = arith.truncf %84 : vector<8x8xf32> to vector<8x8xbf16>
    %c0_53 = arith.constant 0 : index
    %c24_54 = arith.constant 24 : index
    %86 = vector.load %arg22[%c0_53, %c24_54] : memref<8x32xbf16, #tpu.memory_space<vmem>>, vector<8x8xbf16>
    tpu.vector_store %arg22[%c0_53, %c24_54], %85 {strides = array<i32>} : memref<8x32xbf16, #tpu.memory_space<vmem>>, vector<8x8xbf16>,
    %c0_55 = arith.constant 0 : index
    %c0_56 = arith.constant 0 : index
    %87 = vector.load %arg22[%c0_55, %c0_56] : memref<8x32xbf16, #tpu.memory_space<vmem>>, vector<8x32xbf16>
    %c0_57 = arith.constant 0 : index
    %c0_58 = arith.constant 0 : index
    %88 = vector.load %arg7[%c0_57, %c0_58] : memref<32x32xbf16, #tpu.memory_space<vmem>>, vector<32x32xbf16>
    %cst_59 = arith.constant dense<0.000000e+00> : vector<8x32xf32>
    %89 = tpu.matmul %87, %88, %cst_59 {dimension_numbers = #tpu.dot_dimension_numbers<[1], [0], [0], [1], [0, 0, 1, 1], [], []>} : vector<8x32xbf16>, vector<32x32xbf16>, vector<8x32xf32> -> vector<8x32xf32>
    %c0_60 = arith.constant 0 : index
    %c0_61 = arith.constant 0 : index
    %90 = vector.load %arg11[%c0_60, %c0_61] : memref<1x32xf32, #tpu.memory_space<vmem>>, vector<1x32xf32>
    %91 = vector.broadcast %90 : vector<1x32xf32> to vector<8x32xf32>
    %92 = arith.addf %89, %91 : vector<8x32xf32>
    %c0_62 = arith.constant 0 : index
    %c0_63 = arith.constant 0 : index
    %93 = vector.load %arg12[%c0_62, %c0_63] : memref<1x32xf32, #tpu.memory_space<vmem>>, vector<1x32xf32>
    %c0_64 = arith.constant 0 : index
    %c0_65 = arith.constant 0 : index
    %94 = vector.load %arg13[%c0_64, %c0_65] : memref<1x32xf32, #tpu.memory_space<vmem>>, vector<1x32xf32>
    %cst_66 = arith.constant dense<0.000000e+00> : vector<8xf32>
    %95 = vector.multi_reduction <add>, %92, %cst_66 [1] : vector<8x32xf32> to vector<8xf32>
    %96 = vector.shape_cast %95 : vector<8xf32> to vector<8x1xf32>
    %cst_67 = arith.constant 3.200000e+01 : f32
    %97 = vector.broadcast %cst_67 : f32 to vector<8x1xf32>
    %98 = arith.divf %96, %97 : vector<8x1xf32>
    %99 = arith.mulf %92, %92 : vector<8x32xf32>
    %cst_68 = arith.constant dense<0.000000e+00> : vector<8xf32>
    %100 = vector.multi_reduction <add>, %99, %cst_68 [1] : vector<8x32xf32> to vector<8xf32>
    %101 = vector.shape_cast %100 : vector<8xf32> to vector<8x1xf32>
    %cst_69 = arith.constant 3.200000e+01 : f32
    %102 = vector.broadcast %cst_69 : f32 to vector<8x1xf32>
    %103 = arith.divf %101, %102 : vector<8x1xf32>
    %104 = arith.mulf %98, %98 : vector<8x1xf32>
    %105 = arith.subf %103, %104 : vector<8x1xf32>
    %cst_70 = arith.constant 9.99999974E-6 : f32
    %106 = vector.broadcast %cst_70 : f32 to vector<8x1xf32>
    %107 = arith.addf %105, %106 : vector<8x1xf32>
    %108 = math.rsqrt %107 : vector<8x1xf32>
    %109 = vector.broadcast %98 : vector<8x1xf32> to vector<8x32xf32>
    %110 = arith.subf %92, %109 : vector<8x32xf32>
    %111 = vector.broadcast %108 : vector<8x1xf32> to vector<8x32xf32>
    %112 = arith.mulf %110, %111 : vector<8x32xf32>
    %113 = vector.broadcast %93 : vector<1x32xf32> to vector<8x32xf32>
    %114 = arith.mulf %112, %113 : vector<8x32xf32>
    %115 = vector.broadcast %94 : vector<1x32xf32> to vector<8x32xf32>
    %116 = arith.addf %114, %115 : vector<8x32xf32>
    %117 = arith.addf %116, %4 : vector<8x32xf32>
    %118 = arith.truncf %117 : vector<8x32xf32> to vector<8x32xbf16>
    %c0_71 = arith.constant 0 : index
    %c0_72 = arith.constant 0 : index
    %119 = vector.load %arg17[%c0_71, %c0_72] : memref<1x32xf32, #tpu.memory_space<vmem>>, vector<1x32xf32>
    %c0_73 = arith.constant 0 : index
    %c0_74 = arith.constant 0 : index
    %120 = vector.load %arg14[%c0_73, %c0_74] : memref<32x64xbf16, #tpu.memory_space<vmem>>, vector<32x64xbf16>
    %cst_75 = arith.constant dense<0.000000e+00> : vector<8x64xf32>
    %121 = tpu.matmul %118, %120, %cst_75 {dimension_numbers = #tpu.dot_dimension_numbers<[1], [0], [0], [1], [0, 0, 1, 1], [], []>} : vector<8x32xbf16>, vector<32x64xbf16>, vector<8x64xf32> -> vector<8x64xf32>
    %c0_76 = arith.constant 0 : index
    %c0_77 = arith.constant 0 : index
    %122 = vector.load %arg15[%c0_76, %c0_77] : memref<1x64xf32, #tpu.memory_space<vmem>>, vector<1x64xf32>
    %123 = vector.broadcast %122 : vector<1x64xf32> to vector<8x64xf32>
    %124 = arith.addf %121, %123 : vector<8x64xf32>
    %cst_78 = arith.constant 0.000000e+00 : f32
    %125 = vector.broadcast %cst_78 : f32 to vector<8x64xf32>
    %126 = arith.maximumf %124, %125 : vector<8x64xf32>
    %127 = arith.truncf %126 : vector<8x64xf32> to vector<8x64xbf16>
    %c0_79 = arith.constant 0 : index
    %c0_80 = arith.constant 0 : index
    %128 = vector.load %arg16[%c0_79, %c0_80] : memref<64x32xbf16, #tpu.memory_space<vmem>>, vector<64x32xbf16>
    %cst_81 = arith.constant dense<0.000000e+00> : vector<8x32xf32>
    %129 = tpu.matmul %127, %128, %cst_81 {dimension_numbers = #tpu.dot_dimension_numbers<[1], [0], [0], [1], [0, 0, 1, 1], [], []>} : vector<8x64xbf16>, vector<64x32xbf16>, vector<8x32xf32> -> vector<8x32xf32>
    %130 = vector.broadcast %119 : vector<1x32xf32> to vector<8x32xf32>
    %131 = arith.addf %130, %129 : vector<8x32xf32>
    %cst_82 = arith.constant dense<0.000000e+00> : vector<8xf32>
    %132 = vector.multi_reduction <add>, %131, %cst_82 [1] : vector<8x32xf32> to vector<8xf32>
    %133 = vector.shape_cast %132 : vector<8xf32> to vector<8x1xf32>
    %cst_83 = arith.constant 3.200000e+01 : f32
    %134 = vector.broadcast %cst_83 : f32 to vector<8x1xf32>
    %135 = arith.divf %133, %134 : vector<8x1xf32>
    %136 = arith.mulf %131, %131 : vector<8x32xf32>
    %cst_84 = arith.constant dense<0.000000e+00> : vector<8xf32>
    %137 = vector.multi_reduction <add>, %136, %cst_84 [1] : vector<8x32xf32> to vector<8xf32>
    %138 = vector.shape_cast %137 : vector<8xf32> to vector<8x1xf32>
    %cst_85 = arith.constant 3.200000e+01 : f32
    %139 = vector.broadcast %cst_85 : f32 to vector<8x1xf32>
    %140 = arith.divf %138, %139 : vector<8x1xf32>
    %141 = arith.mulf %135, %135 : vector<8x1xf32>
    %142 = arith.subf %140, %141 : vector<8x1xf32>
    %cst_86 = arith.constant 9.99999974E-6 : f32
    %143 = vector.broadcast %cst_86 : f32 to vector<8x1xf32>
    %144 = arith.addf %142, %143 : vector<8x1xf32>
    %145 = math.rsqrt %144 : vector<8x1xf32>
    %146 = vector.broadcast %135 : vector<8x1xf32> to vector<8x32xf32>
    %147 = arith.subf %131, %146 : vector<8x32xf32>
    %148 = vector.broadcast %145 : vector<8x1xf32> to vector<8x32xf32>
    %149 = arith.mulf %147, %148 : vector<8x32xf32>
    %150 = vector.broadcast %93 : vector<1x32xf32> to vector<8x32xf32>
    %151 = arith.mulf %149, %150 : vector<8x32xf32>
    %152 = vector.broadcast %94 : vector<1x32xf32> to vector<8x32xf32>
    %153 = arith.addf %151, %152 : vector<8x32xf32>
    %154 = arith.addf %153, %131 : vector<8x32xf32>
    %c0_87 = arith.constant 0 : index
    %c0_88 = arith.constant 0 : index
    %c0_89 = arith.constant 0 : index
    %155 = vector.load %arg18[%c0_87, %c0_88, %c0_89] : memref<1x8x32xf32, #tpu.memory_space<vmem>>, vector<1x8x32xf32>
    %156 = vector.shape_cast %155 : vector<1x8x32xf32> to vector<8x32xf32>
    %157 = vector.shape_cast %154 : vector<8x32xf32> to vector<1x8x32xf32>
    tpu.vector_store %arg18[%c0_87, %c0_88, %c0_89], %157 {strides = array<i32>} : memref<1x8x32xf32, #tpu.memory_space<vmem>>, vector<1x8x32xf32>,
    return
  }
  func.func @transform_0(%arg0: i32, %arg1: i32) -> (i32, i32, i32) {
    %c0_i32 = arith.constant 0 : i32
    %c0_i32_0 = arith.constant 0 : i32
    return %arg0, %arg1, %c0_i32 : i32, i32, i32
  }
  func.func @transform_1(%arg0: i32, %arg1: i32) -> (i32, i32, i32) {
    %c0_i32 = arith.constant 0 : i32
    %c0_i32_0 = arith.constant 0 : i32
    %c0_i32_1 = arith.constant 0 : i32
    return %arg0, %c0_i32, %c0_i32_0 : i32, i32, i32
  }
  func.func @transform_2(%arg0: i32, %arg1: i32) -> (i32, i32) {
    %c0_i32 = arith.constant 0 : i32
    %c0_i32_0 = arith.constant 0 : i32
    %c0_i32_1 = arith.constant 0 : i32
    return %c0_i32, %c0_i32_0 : i32, i32
  }
  func.func @transform_3(%arg0: i32, %arg1: i32) -> (i32, i32) {
    %c0_i32 = arith.constant 0 : i32
    %c0_i32_0 = arith.constant 0 : i32
    %c0_i32_1 = arith.constant 0 : i32
    return %c0_i32, %c0_i32_0 : i32, i32
  }
  func.func @transform_4(%arg0: i32, %arg1: i32) -> (i32, i32) {
    %c0_i32 = arith.constant 0 : i32
    %c0_i32_0 = arith.constant 0 : i32
    %c0_i32_1 = arith.constant 0 : i32
    return %c0_i32, %c0_i32_0 : i32, i32
  }
  func.func @transform_5(%arg0: i32, %arg1: i32) -> (i32, i32) {
    %c0_i32 = arith.constant 0 : i32
    %c0_i32_0 = arith.constant 0 : i32
    %c0_i32_1 = arith.constant 0 : i32
    return %c0_i32, %c0_i32_0 : i32, i32
  }
  func.func @transform_6(%arg0: i32, %arg1: i32) -> (i32, i32) {
    %c0_i32 = arith.constant 0 : i32
    %c0_i32_0 = arith.constant 0 : i32
    %c0_i32_1 = arith.constant 0 : i32
    return %c0_i32, %c0_i32_0 : i32, i32
  }
  func.func @transform_7(%arg0: i32, %arg1: i32) -> (i32, i32) {
    %c0_i32 = arith.constant 0 : i32
    %c0_i32_0 = arith.constant 0 : i32
    %c0_i32_1 = arith.constant 0 : i32
    return %c0_i32, %c0_i32_0 : i32, i32
  }
  func.func @transform_8(%arg0: i32, %arg1: i32) -> (i32, i32) {
    %c0_i32 = arith.constant 0 : i32
    %c0_i32_0 = arith.constant 0 : i32
    %c0_i32_1 = arith.constant 0 : i32
    return %c0_i32, %c0_i32_0 : i32, i32
  }
  func.func @transform_9(%arg0: i32, %arg1: i32) -> (i32, i32) {
    %c0_i32 = arith.constant 0 : i32
    %c0_i32_0 = arith.constant 0 : i32
    %c0_i32_1 = arith.constant 0 : i32
    return %c0_i32, %c0_i32_0 : i32, i32
  }
  func.func @transform_10(%arg0: i32, %arg1: i32) -> (i32, i32) {
    %c0_i32 = arith.constant 0 : i32
    %c0_i32_0 = arith.constant 0 : i32
    %c0_i32_1 = arith.constant 0 : i32
    return %c0_i32, %c0_i32_0 : i32, i32
  }
  func.func @transform_11(%arg0: i32, %arg1: i32) -> (i32, i32) {
    %c0_i32 = arith.constant 0 : i32
    %c0_i32_0 = arith.constant 0 : i32
    %c0_i32_1 = arith.constant 0 : i32
    return %c0_i32, %c0_i32_0 : i32, i32
  }
  func.func @transform_12(%arg0: i32, %arg1: i32) -> (i32, i32) {
    %c0_i32 = arith.constant 0 : i32
    %c0_i32_0 = arith.constant 0 : i32
    %c0_i32_1 = arith.constant 0 : i32
    return %c0_i32, %c0_i32_0 : i32, i32
  }
  func.func @transform_13(%arg0: i32, %arg1: i32) -> (i32, i32) {
    %c0_i32 = arith.constant 0 : i32
    %c0_i32_0 = arith.constant 0 : i32
    %c0_i32_1 = arith.constant 0 : i32
    return %c0_i32, %c0_i32_0 : i32, i32
  }
  func.func @transform_14(%arg0: i32, %arg1: i32) -> (i32, i32) {
    %c0_i32 = arith.constant 0 : i32
    %c0_i32_0 = arith.constant 0 : i32
    %c0_i32_1 = arith.constant 0 : i32
    return %c0_i32, %c0_i32_0 : i32, i32
  }
  func.func @transform_15(%arg0: i32, %arg1: i32) -> (i32, i32) {
    %c0_i32 = arith.constant 0 : i32
    %c0_i32_0 = arith.constant 0 : i32
    %c0_i32_1 = arith.constant 0 : i32
    return %c0_i32, %c0_i32_0 : i32, i32
  }
  func.func @transform_16(%arg0: i32, %arg1: i32) -> (i32, i32, i32) {
    %c0_i32 = arith.constant 0 : i32
    %c0_i32_0 = arith.constant 0 : i32
    return %arg0, %arg1, %c0_i32 : i32, i32, i32
  }
}

</mosaic_0001>

<llo_original>
// kernel: tpu_custom_call.1
$region0: #{tpu_custom_call.1}
  #allocation0 [shape = 'u32[]', space=smem, size = 0x4, offset = 0x4, fixed_abs, tag = 'smem constant byte address 0x4 - core index']
  #allocation1 [shape = 'u32[144,128]{1,0:T(1,128)}', space=vmem, size = 0x12000, scoped, tag = 'internal scratch']
  #allocation2 [shape = 'bf16[8,32]{1,0:T(8,128)(2,1)}', space=vmem, size = 0x800, scoped, tag = 'scratch operand']
  #allocation3 [shape = 'bf16[8,32]{1,0:T(8,128)(2,1)}', space=vmem, size = 0x800, scoped, tag = 'scratch operand']
  #allocation4 [shape = 'bf16[8,32]{1,0:T(8,128)(2,1)}', space=vmem, size = 0x800, scoped, tag = 'scratch operand']
  #allocation5 [shape = 'bf16[8,32]{1,0:T(8,128)(2,1)}', space=vmem, size = 0x800, scoped, tag = 'scratch operand']
  %s0 = inlined_call_operand.vmem [shape: f32[2,8,32], index: 0, kind: input, shape index: {}]
  %s1 = inlined_call_operand.vmem [shape: f32[2,8,32], index: 1, kind: input, shape index: {}]
  %s2 = inlined_call_operand.vmem [shape: bf16[32,32], index: 2, kind: input, shape index: {}]
  %s3 = inlined_call_operand.hbm [shape: bf16[32,32], index: 3, kind: input, shape index: {}]
  %s4 = inlined_call_operand.hbm [shape: bf16[32,32], index: 4, kind: input, shape index: {}]
  %s5 = inlined_call_operand.hbm [shape: bf16[32,32], index: 5, kind: input, shape index: {}]
  %s6 = inlined_call_operand.vmem [shape: f32[1,32], index: 6, kind: input, shape index: {}]
  %s7 = inlined_call_operand.vmem [shape: f32[1,32], index: 7, kind: input, shape index: {}]
  %s8 = inlined_call_operand.hbm [shape: f32[1,32], index: 8, kind: input, shape index: {}]
  %s9 = inlined_call_operand.hbm [shape: f32[1,32], index: 9, kind: input, shape index: {}]
  %s10 = inlined_call_operand.vmem [shape: f32[1,32], index: 10, kind: input, shape index: {}]
  %s11 = inlined_call_operand.vmem [shape: f32[1,32], index: 11, kind: input, shape index: {}]
  %s12 = inlined_call_operand.vmem [shape: bf16[32,64], index: 12, kind: input, shape index: {}]
  %s13 = inlined_call_operand.vmem [shape: f32[1,64], index: 13, kind: input, shape index: {}]
  %s14 = inlined_call_operand.vmem [shape: bf16[64,32], index: 14, kind: input, shape index: {}]
  %s15 = inlined_call_operand.vmem [shape: f32[1,32], index: 15, kind: input, shape index: {}]
  %s16 = inlined_call_operand.hbm [shape: f32[2,8,32], index: 16, kind: output, shape index: {}]
  %s17 = sld [smem:[#allocation0]]
  $region121: #{tpu_custom_call.1} parent=0
    _
  %s19 = ssub.s32 1, %s17
  %s20 = scalar_select 0, %s19, %s17
  $region1: #{tpu_custom_call.1} parent=0
    #allocation6 [shape = 'u8[8192]{0}', space=vmem, size = 0x2000, scoped, tag = 'input window, operand 3, single buffered']
    #allocation7 [shape = 's32[2]{0}', space=sflag, size = 0x8, scoped, tag = 'scoped memory for tpu_custom_call.1']
    #allocation8 [shape = 's32[2]{0}', space=sflag, size = 0x8, scoped, tag = 'scoped memory for tpu_custom_call.1']
    #allocation9 [shape = 'u8[8192]{0}', space=vmem, size = 0x2000, scoped, tag = 'input window, operand 4, single buffered']
    #allocation10 [shape = 's32[1]{0}', space=sflag, size = 0x4, scoped, tag = 'scoped memory for tpu_custom_call.1']
    #allocation11 [shape = 'u8[8192]{0}', space=vmem, size = 0x2000, scoped, tag = 'input window, operand 5, single buffered']
    #allocation12 [shape = 'u8[512]{0}', space=vmem, size = 0x400, scoped, tag = 'input window, operand 8, single buffered']
    #allocation13 [shape = 's32[1]{0}', space=sflag, size = 0x4, scoped, tag = 'scoped memory for tpu_custom_call.1']
    #allocation14 [shape = 'u8[512]{0}', space=vmem, size = 0x400, scoped, tag = 'input window, operand 9, single buffered']
    #allocation15 [shape = 'u8[8192]{0}', space=vmem, size = 0x2000, scoped, tag = 'output window, operand 0']
    %21 = vsyncpa [#allocation7], 0
    %22 = vsyncpa [#allocation10], 0
    %23 = vsyncpa [#allocation13], 0
    %24 = vsyncpa [#allocation8], 0
    %s25 = scalar_lea.sflag [#allocation8], 1
    %26 = vsyncpa %s25, 0
    loop: start=0, step=1, limit=4
    $region2: #{tpu_custom_call.1} parent=1 // loop_pre_header
      _
    $region3: #{tpu_custom_call.1} parent=1 // loop_header
      %s28 = sphi 0, %s32
      %p29 = scmp.ge.s32.totalorder %s28, 4
      %s35 = sphi 0, %s47
      %s36 = sphi 0, %s43
      %s37 = sphi 0, %s35
      %s38 = sphi 0, %s36
      %s39 = sphi 0, %s37
      %s40 = sphi 0, %s38
      %s52 = sphi 0, %s54
      %s55 = sphi 0, %s52
      %s56 = sphi 0, %s55
      %s72 = sphi 0, %s56
      %s78 = sphi 0, %s80
      %s81 = sphi 0, %s78
      %s82 = sphi 0, %s81
      %s98 = sphi 0, %s82
      %s102 = sphi 0, %s102
      %s104 = sphi 0, %s102
      %s105 = sphi 0, %s104
      %s119 = sphi 0, %s105
      %s123 = sphi 0, %s123
      %s125 = sphi 0, %s123
      %s126 = sphi 0, %s125
      %s140 = sphi 0, %s126
      %s144 = sphi 0, %s144
      %s146 = sphi 0, %s144
      %s147 = sphi 0, %s146
      %s161 = sphi 0, %s147
      %s165 = sphi 0, %s165
      %s167 = sphi 0, %s165
      %s168 = sphi 0, %s167
      %s182 = sphi 0, %s168
      %s186 = sphi 0, %s186
      %s188 = sphi 0, %s186
      %s189 = sphi 0, %s188
      %s203 = sphi 0, %s189
      %s207 = sphi 0, %s207
      %s209 = sphi 0, %s207
      %s210 = sphi 0, %s209
      %s224 = sphi 0, %s210
      %s228 = sphi 0, %s228
      %s230 = sphi 0, %s228
      %s231 = sphi 0, %s230
      %s245 = sphi 0, %s231
      %s249 = sphi 0, %s249
      %s251 = sphi 0, %s249
      %s252 = sphi 0, %s251
      %s266 = sphi 0, %s252
      %s270 = sphi 0, %s270
      %s272 = sphi 0, %s270
      %s273 = sphi 0, %s272
      %s287 = sphi 0, %s273
      %s291 = sphi 0, %s291
      %s293 = sphi 0, %s291
      %s294 = sphi 0, %s293
      %s308 = sphi 0, %s294
      %s312 = sphi 0, %s312
      %s314 = sphi 0, %s312
      %s315 = sphi 0, %s314
      %s329 = sphi 0, %s315
      %s333 = sphi 0, %s333
      %s335 = sphi 0, %s333
      %s336 = sphi 0, %s335
      %s350 = sphi 0, %s336
      %s354 = sphi 0, %s354
      %s356 = sphi 0, %s354
      %s357 = sphi 0, %s356
      %s371 = sphi 0, %s357
      %s375 = sphi 0, %s375
      %s377 = sphi 0, %s375
      %s378 = sphi 0, %s377
      %s392 = sphi 0, %s378
      %s400 = sphi 0, %s402
      %s403 = sphi 0, %s400
      %s404 = sphi 0, %s403
      %s420 = sphi 0, %s404
    $region4: #{tpu_custom_call.1} parent=1 // loop_header_branch
      %31 = sbr.rel (%p29) target = $region8
    $region5: #{tpu_custom_call.1} parent=1 // loop_body
      %s33 = ssub.s32 %s28, 1
      %s34 = ssub.s32 %s28, 2
      %s41 = sadd.s32 1, %s36
      %p42 = scmp.ge.s32.totalorder %s41, 1
      %s43 = scalar_select %p42, 0, %s41
      %s44 = sadd.s32 1, %s35
      %s45 = scalar_select %p42, %s44, %s35
      %p46 = scmp.ge.s32.totalorder %s45, 2
      %s47 = scalar_select %p46, 0, %s45
      %s48 = ssub.s32 %s35, %s47
      %s49 = ssub.s32 %s36, %s43
      %s50 = sor.u32 %s48, %s49
      %p51 = scmp.eq.s32.totalorder %s50, 0
      %s53 = sadd.s32 %s52, 1
      %s54 = scalar_select %p51, %s52, %s53
      %p57 = pneg %p51
      %p58 = scmp.eq.s32.totalorder %s28, 1
      %p59 = por %p57, %p58
      %p60 = scmp.ne.s32.totalorder %s52, %s55
      %p61 = scmp.eq.s32.totalorder %s28, 0
      %p62 = por %p60, %p61
      %p63 = scmp.ne.s32.totalorder %s52, %s55
      %p64 = scmp.eq.s32.totalorder %s33, 1
      %p65 = por %p63, %p64
      %p66 = scmp.ne.s32.totalorder %s55, %s56
      %p67 = scmp.eq.s32.totalorder %s33, 0
      %p68 = por %p66, %p67
      %p69 = scmp.ne.s32.totalorder %s55, %s56
      %p70 = scmp.eq.s32.totalorder %s34, 1
      %p71 = por %p69, %p70
      %p73 = scmp.ne.s32.totalorder %s56, %s72
      %p74 = scmp.eq.s32.totalorder %s34, 0
      %p75 = por %p73, %p74
      %s76 = ssub.s32 %s35, %s47
      %p77 = scmp.eq.s32.totalorder %s76, 0
      %s79 = sadd.s32 %s78, 1
      %s80 = scalar_select %p77, %s78, %s79
      %p83 = pneg %p77
      %p84 = scmp.eq.s32.totalorder %s28, 1
      %p85 = por %p83, %p84
      %p86 = scmp.ne.s32.totalorder %s78, %s81
      %p87 = scmp.eq.s32.totalorder %s28, 0
      %p88 = por %p86, %p87
      %p89 = scmp.ne.s32.totalorder %s78, %s81
      %p90 = scmp.eq.s32.totalorder %s33, 1
      %p91 = por %p89, %p90
      %p92 = scmp.ne.s32.totalorder %s81, %s82
      %p93 = scmp.eq.s32.totalorder %s33, 0
      %p94 = por %p92, %p93
      %p95 = scmp.ne.s32.totalorder %s81, %s82
      %p96 = scmp.eq.s32.totalorder %s34, 1
      %p97 = por %p95, %p96
      %p99 = scmp.ne.s32.totalorder %s82, %s98
      %p100 = scmp.eq.s32.totalorder %s34, 0
      %p101 = por %p99, %p100
      %s103 = sadd.s32 %s102, 1
      %p106 = scmp.eq.s32.totalorder %s28, 1
      %p107 = scmp.ne.s32.totalorder %s102, %s104
      %p108 = scmp.eq.s32.totalorder %s28, 0
      %p109 = por %p107, %p108
      %p110 = scmp.ne.s32.totalorder %s102, %s104
      %p111 = scmp.eq.s32.totalorder %s33, 1
      %p112 = por %p110, %p111
      %p113 = scmp.ne.s32.totalorder %s104, %s105
      %p114 = scmp.eq.s32.totalorder %s33, 0
      %p115 = por %p113, %p114
      %p116 = scmp.ne.s32.totalorder %s104, %s105
      %p117 = scmp.eq.s32.totalorder %s34, 1
      %p118 = por %p116, %p117
      %p120 = scmp.ne.s32.totalorder %s105, %s119
      %p121 = scmp.eq.s32.totalorder %s34, 0
      %p122 = por %p120, %p121
      %s124 = sadd.s32 %s123, 1
      %p127 = scmp.eq.s32.totalorder %s28, 1
      %p128 = scmp.ne.s32.totalorder %s123, %s125
      %p129 = scmp.eq.s32.totalorder %s28, 0
      %p130 = por %p128, %p129
      %p131 = scmp.ne.s32.totalorder %s123, %s125
      %p132 = scmp.eq.s32.totalorder %s33, 1
      %p133 = por %p131, %p132
      %p134 = scmp.ne.s32.totalorder %s125, %s126
      %p135 = scmp.eq.s32.totalorder %s33, 0
      %p136 = por %p134, %p135
      %p137 = scmp.ne.s32.totalorder %s125, %s126
      %p138 = scmp.eq.s32.totalorder %s34, 1
      %p139 = por %p137, %p138
      %p141 = scmp.ne.s32.totalorder %s126, %s140
      %p142 = scmp.eq.s32.totalorder %s34, 0
      %p143 = por %p141, %p142
      %s145 = sadd.s32 %s144, 1
      %p148 = scmp.eq.s32.totalorder %s28, 1
      %p149 = scmp.ne.s32.totalorder %s144, %s146
      %p150 = scmp.eq.s32.totalorder %s28, 0
      %p151 = por %p149, %p150
      %p152 = scmp.ne.s32.totalorder %s144, %s146
      %p153 = scmp.eq.s32.totalorder %s33, 1
      %p154 = por %p152, %p153
      %p155 = scmp.ne.s32.totalorder %s146, %s147
      %p156 = scmp.eq.s32.totalorder %s33, 0
      %p157 = por %p155, %p156
      %p158 = scmp.ne.s32.totalorder %s146, %s147
      %p159 = scmp.eq.s32.totalorder %s34, 1
      %p160 = por %p158, %p159
      %p162 = scmp.ne.s32.totalorder %s147, %s161
      %p163 = scmp.eq.s32.totalorder %s34, 0
      %p164 = por %p162, %p163
      %s166 = sadd.s32 %s165, 1
      %p169 = scmp.eq.s32.totalorder %s28, 1
      %p170 = scmp.ne.s32.totalorder %s165, %s167
      %p171 = scmp.eq.s32.totalorder %s28, 0
      %p172 = por %p170, %p171
      %p173 = scmp.ne.s32.totalorder %s165, %s167
      %p174 = scmp.eq.s32.totalorder %s33, 1
      %p175 = por %p173, %p174
      %p176 = scmp.ne.s32.totalorder %s167, %s168
      %p177 = scmp.eq.s32.totalorder %s33, 0
      %p178 = por %p176, %p177
      %p179 = scmp.ne.s32.totalorder %s167, %s168
      %p180 = scmp.eq.s32.totalorder %s34, 1
      %p181 = por %p179, %p180
      %p183 = scmp.ne.s32.totalorder %s168, %s182
      %p184 = scmp.eq.s32.totalorder %s34, 0
      %p185 = por %p183, %p184
      %s187 = sadd.s32 %s186, 1
      %p190 = scmp.eq.s32.totalorder %s28, 1
      %p191 = scmp.ne.s32.totalorder %s186, %s188
      %p192 = scmp.eq.s32.totalorder %s28, 0
      %p193 = por %p191, %p192
      %p194 = scmp.ne.s32.totalorder %s186, %s188
      %p195 = scmp.eq.s32.totalorder %s33, 1
      %p196 = por %p194, %p195
      %p197 = scmp.ne.s32.totalorder %s188, %s189
      %p198 = scmp.eq.s32.totalorder %s33, 0
      %p199 = por %p197, %p198
      %p200 = scmp.ne.s32.totalorder %s188, %s189
      %p201 = scmp.eq.s32.totalorder %s34, 1
      %p202 = por %p200, %p201
      %p204 = scmp.ne.s32.totalorder %s189, %s203
      %p205 = scmp.eq.s32.totalorder %s34, 0
      %p206 = por %p204, %p205
      %s208 = sadd.s32 %s207, 1
      %p211 = scmp.eq.s32.totalorder %s28, 1
      %p212 = scmp.ne.s32.totalorder %s207, %s209
      %p213 = scmp.eq.s32.totalorder %s28, 0
      %p214 = por %p212, %p213
      %p215 = scmp.ne.s32.totalorder %s207, %s209
      %p216 = scmp.eq.s32.totalorder %s33, 1
      %p217 = por %p215, %p216
      %p218 = scmp.ne.s32.totalorder %s209, %s210
      %p219 = scmp.eq.s32.totalorder %s33, 0
      %p220 = por %p218, %p219
      %p221 = scmp.ne.s32.totalorder %s209, %s210
      %p222 = scmp.eq.s32.totalorder %s34, 1
      %p223 = por %p221, %p222
      %p225 = scmp.ne.s32.totalorder %s210, %s224
      %p226 = scmp.eq.s32.totalorder %s34, 0
      %p227 = por %p225, %p226
      %s229 = sadd.s32 %s228, 1
      %p232 = scmp.eq.s32.totalorder %s28, 1
      %p233 = scmp.ne.s32.totalorder %s228, %s230
      %p234 = scmp.eq.s32.totalorder %s28, 0
      %p235 = por %p233, %p234
      %p236 = scmp.ne.s32.totalorder %s228, %s230
      %p237 = scmp.eq.s32.totalorder %s33, 1
      %p238 = por %p236, %p237
      %p239 = scmp.ne.s32.totalorder %s230, %s231
      %p240 = scmp.eq.s32.totalorder %s33, 0
      %p241 = por %p239, %p240
      %p242 = scmp.ne.s32.totalorder %s230, %s231
      %p243 = scmp.eq.s32.totalorder %s34, 1
      %p244 = por %p242, %p243
      %p246 = scmp.ne.s32.totalorder %s231, %s245
      %p247 = scmp.eq.s32.totalorder %s34, 0
      %p248 = por %p246, %p247
      %s250 = sadd.s32 %s249, 1
      %p253 = scmp.eq.s32.totalorder %s28, 1
      %p254 = scmp.ne.s32.totalorder %s249, %s251
      %p255 = scmp.eq.s32.totalorder %s28, 0
      %p256 = por %p254, %p255
      %p257 = scmp.ne.s32.totalorder %s249, %s251
      %p258 = scmp.eq.s32.totalorder %s33, 1
      %p259 = por %p257, %p258
      %p260 = scmp.ne.s32.totalorder %s251, %s252
      %p261 = scmp.eq.s32.totalorder %s33, 0
      %p262 = por %p260, %p261
      %p263 = scmp.ne.s32.totalorder %s251, %s252
      %p264 = scmp.eq.s32.totalorder %s34, 1
      %p265 = por %p263, %p264
      %p267 = scmp.ne.s32.totalorder %s252, %s266
      %p268 = scmp.eq.s32.totalorder %s34, 0
      %p269 = por %p267, %p268
      %s271 = sadd.s32 %s270, 1
      %p274 = scmp.eq.s32.totalorder %s28, 1
      %p275 = scmp.ne.s32.totalorder %s270, %s272
      %p276 = scmp.eq.s32.totalorder %s28, 0
      %p277 = por %p275, %p276
      %p278 = scmp.ne.s32.totalorder %s270, %s272
      %p279 = scmp.eq.s32.totalorder %s33, 1
      %p280 = por %p278, %p279
      %p281 = scmp.ne.s32.totalorder %s272, %s273
      %p282 = scmp.eq.s32.totalorder %s33, 0
      %p283 = por %p281, %p282
      %p284 = scmp.ne.s32.totalorder %s272, %s273
      %p285 = scmp.eq.s32.totalorder %s34, 1
      %p286 = por %p284, %p285
      %p288 = scmp.ne.s32.totalorder %s273, %s287
      %p289 = scmp.eq.s32.totalorder %s34, 0
      %p290 = por %p288, %p289
      %s292 = sadd.s32 %s291, 1
      %p295 = scmp.eq.s32.totalorder %s28, 1
      %p296 = scmp.ne.s32.totalorder %s291, %s293
      %p297 = scmp.eq.s32.totalorder %s28, 0
      %p298 = por %p296, %p297
      %p299 = scmp.ne.s32.totalorder %s291, %s293
      %p300 = scmp.eq.s32.totalorder %s33, 1
      %p301 = por %p299, %p300
      %p302 = scmp.ne.s32.totalorder %s293, %s294
      %p303 = scmp.eq.s32.totalorder %s33, 0
      %p304 = por %p302, %p303
      %p305 = scmp.ne.s32.totalorder %s293, %s294
      %p306 = scmp.eq.s32.totalorder %s34, 1
      %p307 = por %p305, %p306
      %p309 = scmp.ne.s32.totalorder %s294, %s308
      %p310 = scmp.eq.s32.totalorder %s34, 0
      %p311 = por %p309, %p310
      %s313 = sadd.s32 %s312, 1
      %p316 = scmp.eq.s32.totalorder %s28, 1
      %p317 = scmp.ne.s32.totalorder %s312, %s314
      %p318 = scmp.eq.s32.totalorder %s28, 0
      %p319 = por %p317, %p318
      %p320 = scmp.ne.s32.totalorder %s312, %s314
      %p321 = scmp.eq.s32.totalorder %s33, 1
      %p322 = por %p320, %p321
      %p323 = scmp.ne.s32.totalorder %s314, %s315
      %p324 = scmp.eq.s32.totalorder %s33, 0
      %p325 = por %p323, %p324
      %p326 = scmp.ne.s32.totalorder %s314, %s315
      %p327 = scmp.eq.s32.totalorder %s34, 1
      %p328 = por %p326, %p327
      %p330 = scmp.ne.s32.totalorder %s315, %s329
      %p331 = scmp.eq.s32.totalorder %s34, 0
      %p332 = por %p330, %p331
      %s334 = sadd.s32 %s333, 1
      %p337 = scmp.eq.s32.totalorder %s28, 1
      %p338 = scmp.ne.s32.totalorder %s333, %s335
      %p339 = scmp.eq.s32.totalorder %s28, 0
      %p340 = por %p338, %p339
      %p341 = scmp.ne.s32.totalorder %s333, %s335
      %p342 = scmp.eq.s32.totalorder %s33, 1
      %p343 = por %p341, %p342
      %p344 = scmp.ne.s32.totalorder %s335, %s336
      %p345 = scmp.eq.s32.totalorder %s33, 0
      %p346 = por %p344, %p345
      %p347 = scmp.ne.s32.totalorder %s335, %s336
      %p348 = scmp.eq.s32.totalorder %s34, 1
      %p349 = por %p347, %p348
      %p351 = scmp.ne.s32.totalorder %s336, %s350
      %p352 = scmp.eq.s32.totalorder %s34, 0
      %p353 = por %p351, %p352
      %s355 = sadd.s32 %s354, 1
      %p358 = scmp.eq.s32.totalorder %s28, 1
      %p359 = scmp.ne.s32.totalorder %s354, %s356
      %p360 = scmp.eq.s32.totalorder %s28, 0
      %p361 = por %p359, %p360
      %p362 = scmp.ne.s32.totalorder %s354, %s356
      %p363 = scmp.eq.s32.totalorder %s33, 1
      %p364 = por %p362, %p363
      %p365 = scmp.ne.s32.totalorder %s356, %s357
      %p366 = scmp.eq.s32.totalorder %s33, 0
      %p367 = por %p365, %p366
      %p368 = scmp.ne.s32.totalorder %s356, %s357
      %p369 = scmp.eq.s32.totalorder %s34, 1
      %p370 = por %p368, %p369
      %p372 = scmp.ne.s32.totalorder %s357, %s371
      %p373 = scmp.eq.s32.totalorder %s34, 0
      %p374 = por %p372, %p373
      %s376 = sadd.s32 %s375, 1
      %p379 = scmp.eq.s32.totalorder %s28, 1
      %p380 = scmp.ne.s32.totalorder %s375, %s377
      %p381 = scmp.eq.s32.totalorder %s28, 0
      %p382 = por %p380, %p381
      %p383 = scmp.ne.s32.totalorder %s375, %s377
      %p384 = scmp.eq.s32.totalorder %s33, 1
      %p385 = por %p383, %p384
      %p386 = scmp.ne.s32.totalorder %s377, %s378
      %p387 = scmp.eq.s32.totalorder %s33, 0
      %p388 = por %p386, %p387
      %p389 = scmp.ne.s32.totalorder %s377, %s378
      %p390 = scmp.eq.s32.totalorder %s34, 1
      %p391 = por %p389, %p390
      %p393 = scmp.ne.s32.totalorder %s378, %s392
      %p394 = scmp.eq.s32.totalorder %s34, 0
      %p395 = por %p393, %p394
      %s396 = ssub.s32 %s35, %s47
      %s397 = ssub.s32 %s36, %s43
      %s398 = sor.u32 %s396, %s397
      %p399 = scmp.eq.s32.totalorder %s398, 0
      %s401 = sadd.s32 %s400, 1
      %s402 = scalar_select %p399, %s400, %s401
      %p405 = pneg %p399
      %p406 = scmp.eq.s32.totalorder %s28, 1
      %p407 = por %p405, %p406
      %p408 = scmp.ne.s32.totalorder %s400, %s403
      %p409 = scmp.eq.s32.totalorder %s28, 0
      %p410 = por %p408, %p409
      %p411 = scmp.ne.s32.totalorder %s400, %s403
      %p412 = scmp.eq.s32.totalorder %s33, 1
      %p413 = por %p411, %p412
      %p414 = scmp.ne.s32.totalorder %s403, %s404
      %p415 = scmp.eq.s32.totalorder %s33, 0
      %p416 = por %p414, %p415
      %p417 = scmp.ne.s32.totalorder %s403, %s404
      %p418 = scmp.eq.s32.totalorder %s34, 1
      %p419 = por %p417, %p418
      %p421 = scmp.ne.s32.totalorder %s404, %s420
      %p422 = scmp.eq.s32.totalorder %s34, 0
      %p423 = por %p421, %p422
      %p424 = scmp.le.s32.totalorder 1, %s28
      %p425 = scmp.lt.s32.totalorder %s28, 3
      %p426 = pnand %p424, %p425
      %p427 = pneg %p426
      // Predicated region
      $region9: #{tpu_custom_call.1} parent=5 // pred_check
        _
      $region10: #{tpu_custom_call.1} parent=5 // pred_check_branch
        %429 = sbr.rel (%p426) target = $region12
      $region11: #{tpu_custom_call.1} parent=5 // pred_region
        %s430 = ssub.s32 %s28, 1
        // Predicated region
        $region13: #{tpu_custom_call.1} parent=11 // pred_check
          %p431 = pneg %p115
        $region14: #{tpu_custom_call.1} parent=11 // pred_check_branch
          %433 = sbr.rel (%p431) target = $region16
        $region15: #{tpu_custom_call.1} parent=11 // pred_region
          _
        $region16: #{tpu_custom_call.1} parent=11 // pred_fallthru
          _
        // Predicated region
        $region17: #{tpu_custom_call.1} parent=11 // pred_check
          %p434 = pneg %p136
        $region18: #{tpu_custom_call.1} parent=11 // pred_check_branch
          %436 = sbr.rel (%p434) target = $region20
        $region19: #{tpu_custom_call.1} parent=11 // pred_region
          %s438 = ssub.s32 256, 256
          %439 = vsyncadd [#allocation7], %s438
          %s440 = sshll.u32 [#allocation6], 4
          %s441 = int_to_ptr.vmem [resolvable:$true] %s440
          %446 = dma.hbm_to_vmem [thread:$0]  %s3, 256, %s441, [#allocation7], 64, 64, 4
        $region20: #{tpu_custom_call.1} parent=11 // pred_fallthru
          _
        // Predicated region
        $region21: #{tpu_custom_call.1} parent=11 // pred_check
          %p447 = pneg %p157
        $region22: #{tpu_custom_call.1} parent=11 // pred_check_branch
          %449 = sbr.rel (%p447) target = $region24
        $region23: #{tpu_custom_call.1} parent=11 // pred_region
          %s451 = ssub.s32 256, 256
          %452 = vsyncadd [#allocation10], %s451
          %s453 = sshll.u32 [#allocation9], 4
          %s454 = int_to_ptr.vmem [resolvable:$true] %s453
          %459 = dma.hbm_to_vmem [thread:$0]  %s4, 256, %s454, [#allocation10], 64, 64, 4
        $region24: #{tpu_custom_call.1} parent=11 // pred_fallthru
          _
        // Predicated region
        $region25: #{tpu_custom_call.1} parent=11 // pred_check
          %p460 = pneg %p178
        $region26: #{tpu_custom_call.1} parent=11 // pred_check_branch
          %462 = sbr.rel (%p460) target = $region28
        $region27: #{tpu_custom_call.1} parent=11 // pred_region
          %s464 = ssub.s32 256, 256
          %465 = vsyncadd [#allocation10], %s464
          %s466 = sshll.u32 [#allocation11], 4
          %s467 = int_to_ptr.vmem [resolvable:$true] %s466
          %472 = dma.hbm_to_vmem [thread:$0]  %s5, 256, %s467, [#allocation10], 64, 64, 4
        $region28: #{tpu_custom_call.1} parent=11 // pred_fallthru
          _
        // Predicated region
        $region29: #{tpu_custom_call.1} parent=11 // pred_check
          %p473 = pneg %p199
        $region30: #{tpu_custom_call.1} parent=11 // pred_check_branch
          %475 = sbr.rel (%p473) target = $region32
        $region31: #{tpu_custom_call.1} parent=11 // pred_region
          _
        $region32: #{tpu_custom_call.1} parent=11 // pred_fallthru
          _
        // Predicated region
        $region33: #{tpu_custom_call.1} parent=11 // pred_check
          %p476 = pneg %p220
        $region34: #{tpu_custom_call.1} parent=11 // pred_check_branch
          %478 = sbr.rel (%p476) target = $region36
        $region35: #{tpu_custom_call.1} parent=11 // pred_region
          _
        $region36: #{tpu_custom_call.1} parent=11 // pred_fallthru
          _
        // Predicated region
        $region37: #{tpu_custom_call.1} parent=11 // pred_check
          %p479 = pneg %p241
        $region38: #{tpu_custom_call.1} parent=11 // pred_check_branch
          %481 = sbr.rel (%p479) target = $region40
        $region39: #{tpu_custom_call.1} parent=11 // pred_region
          %s483 = ssub.s32 16, 16
          %484 = vsyncadd [#allocation13], %s483
          %s486 = sshll.u32 [#allocation12], 4
          %s487 = int_to_ptr.vmem [resolvable:$true] %s486
          %489 = dma.hbm_to_vmem [thread:$0]  %s8, 16, %s487, [#allocation13]
        $region40: #{tpu_custom_call.1} parent=11 // pred_fallthru
          _
        // Predicated region
        $region41: #{tpu_custom_call.1} parent=11 // pred_check
          %p490 = pneg %p262
        $region42: #{tpu_custom_call.1} parent=11 // pred_check_branch
          %492 = sbr.rel (%p490) target = $region44
        $region43: #{tpu_custom_call.1} parent=11 // pred_region
          %s494 = ssub.s32 16, 16
          %495 = vsyncadd [#allocation13], %s494
          %s497 = sshll.u32 [#allocation14], 4
          %s498 = int_to_ptr.vmem [resolvable:$true] %s497
          %500 = dma.hbm_to_vmem [thread:$0]  %s9, 16, %s498, [#allocation13]
        $region44: #{tpu_custom_call.1} parent=11 // pred_fallthru
          _
        // Predicated region
        $region45: #{tpu_custom_call.1} parent=11 // pred_check
          %p501 = pneg %p283
        $region46: #{tpu_custom_call.1} parent=11 // pred_check_branch
          %503 = sbr.rel (%p501) target = $region48
        $region47: #{tpu_custom_call.1} parent=11 // pred_region
          _
        $region48: #{tpu_custom_call.1} parent=11 // pred_fallthru
          _
        // Predicated region
        $region49: #{tpu_custom_call.1} parent=11 // pred_check
          %p504 = pneg %p304
        $region50: #{tpu_custom_call.1} parent=11 // pred_check_branch
          %506 = sbr.rel (%p504) target = $region52
        $region51: #{tpu_custom_call.1} parent=11 // pred_region
          _
        $region52: #{tpu_custom_call.1} parent=11 // pred_fallthru
          _
        // Predicated region
        $region53: #{tpu_custom_call.1} parent=11 // pred_check
          %p507 = pneg %p325
        $region54: #{tpu_custom_call.1} parent=11 // pred_check_branch
          %509 = sbr.rel (%p507) target = $region56
        $region55: #{tpu_custom_call.1} parent=11 // pred_region
          _
        $region56: #{tpu_custom_call.1} parent=11 // pred_fallthru
          _
        // Predicated region
        $region57: #{tpu_custom_call.1} parent=11 // pred_check
          %p510 = pneg %p346
        $region58: #{tpu_custom_call.1} parent=11 // pred_check_branch
          %512 = sbr.rel (%p510) target = $region60
        $region59: #{tpu_custom_call.1} parent=11 // pred_region
          _
        $region60: #{tpu_custom_call.1} parent=11 // pred_fallthru
          _
        // Predicated region
        $region61: #{tpu_custom_call.1} parent=11 // pred_check
          %p513 = pneg %p367
        $region62: #{tpu_custom_call.1} parent=11 // pred_check_branch
          %515 = sbr.rel (%p513) target = $region64
        $region63: #{tpu_custom_call.1} parent=11 // pred_region
          _
        $region64: #{tpu_custom_call.1} parent=11 // pred_fallthru
          _
        // Predicated region
        $region65: #{tpu_custom_call.1} parent=11 // pred_check
          %p516 = pneg %p388
        $region66: #{tpu_custom_call.1} parent=11 // pred_check_branch
          %518 = sbr.rel (%p516) target = $region68
        $region67: #{tpu_custom_call.1} parent=11 // pred_region
          _
        $region68: #{tpu_custom_call.1} parent=11 // pred_fallthru
          _
      $region12: #{tpu_custom_call.1} parent=5 // pred_fallthru
        _
      %p519 = scmp.lt.s32.totalorder %s28, 2
      // Predicated region
      $region69: #{tpu_custom_call.1} parent=5 // pred_check
        %p520 = pneg %p519
      $region70: #{tpu_custom_call.1} parent=5 // pred_check_branch
        %522 = sbr.rel (%p520) target = $region72
      $region71: #{tpu_custom_call.1} parent=5 // pred_region
        // Predicated region
        $region73: #{tpu_custom_call.1} parent=71 // pred_check
          %p523 = pneg %p62
        $region74: #{tpu_custom_call.1} parent=71 // pred_check_branch
          %525 = sbr.rel (%p523) target = $region76
        $region75: #{tpu_custom_call.1} parent=71 // pred_region
          %p526 = scmp.lt.s32.totalorder %s35, 1
          %s527 = scalar_select %p526, %s35, 1
          %p528 = scmp.lt.s32.totalorder %s36, 0
          %s529 = scalar_select %p528, %s36, 0
          %s530 = sadd.s32 %s529, %s527
          %s531 = smul.addr %s530, 8
          %s532 = scalar_lea.vmem %s0, %s531
        $region76: #{tpu_custom_call.1} parent=71 // pred_fallthru
          _
        // Predicated region
        $region77: #{tpu_custom_call.1} parent=71 // pred_check
          %p533 = pneg %p88
        $region78: #{tpu_custom_call.1} parent=71 // pred_check_branch
          %535 = sbr.rel (%p533) target = $region80
        $region79: #{tpu_custom_call.1} parent=71 // pred_region
          %p536 = scmp.lt.s32.totalorder %s35, 1
          %s537 = scalar_select %p536, %s35, 1
          %s538 = smul.addr %s537, 8
          %s539 = scalar_lea.vmem %s1, %s538
        $region80: #{tpu_custom_call.1} parent=71 // pred_fallthru
          _
      $region72: #{tpu_custom_call.1} parent=5 // pred_fallthru
        _
      %p540 = scmp.le.s32.totalorder 1, %s28
      %p541 = scmp.lt.s32.totalorder %s28, 3
      %p542 = pnand %p540, %p541
      %p543 = pneg %p542
      // Predicated region
      $region81: #{tpu_custom_call.1} parent=5 // pred_check
        _
      $region82: #{tpu_custom_call.1} parent=5 // pred_check_branch
        %545 = sbr.rel (%p542) target = $region84
      $region83: #{tpu_custom_call.1} parent=5 // pred_region
        %s546 = ssub.s32 %s28, 1
        // Predicated region
        $region85: #{tpu_custom_call.1} parent=83 // pred_check
          %p547 = pneg %p136
        $region86: #{tpu_custom_call.1} parent=83 // pred_check_branch
          %549 = sbr.rel (%p547) target = $region88
        $region87: #{tpu_custom_call.1} parent=83 // pred_region
          %550 = dma.done [#allocation7], 256
        $region88: #{tpu_custom_call.1} parent=83 // pred_fallthru
          _
        // Predicated region
        $region89: #{tpu_custom_call.1} parent=83 // pred_check
          %p551 = pneg %p157
        $region90: #{tpu_custom_call.1} parent=83 // pred_check_branch
          %553 = sbr.rel (%p551) target = $region92
        $region91: #{tpu_custom_call.1} parent=83 // pred_region
          %554 = dma.done [#allocation10], 256
        $region92: #{tpu_custom_call.1} parent=83 // pred_fallthru
          _
        // Predicated region
        $region93: #{tpu_custom_call.1} parent=83 // pred_check
          %p555 = pneg %p178
        $region94: #{tpu_custom_call.1} parent=83 // pred_check_branch
          %557 = sbr.rel (%p555) target = $region96
        $region95: #{tpu_custom_call.1} parent=83 // pred_region
          %558 = dma.done [#allocation10], 256
        $region96: #{tpu_custom_call.1} parent=83 // pred_fallthru
          _
        // Predicated region
        $region97: #{tpu_custom_call.1} parent=83 // pred_check
          %p559 = pneg %p241
        $region98: #{tpu_custom_call.1} parent=83 // pred_check_branch
          %561 = sbr.rel (%p559) target = $region100
        $region99: #{tpu_custom_call.1} parent=83 // pred_region
          %562 = dma.done [#allocation13], 16
        $region100: #{tpu_custom_call.1} parent=83 // pred_fallthru
          _
        // Predicated region
        $region101: #{tpu_custom_call.1} parent=83 // pred_check
          %p563 = pneg %p262
        $region102: #{tpu_custom_call.1} parent=83 // pred_check_branch
          %565 = sbr.rel (%p563) target = $region104
        $region103: #{tpu_custom_call.1} parent=83 // pred_region
          %566 = dma.done [#allocation13], 16
        $region104: #{tpu_custom_call.1} parent=83 // pred_fallthru
          _
        %p567 = scmp.lt.s32.totalorder %s37, 1
        %s568 = scalar_select %p567, %s37, 1
        %p569 = scmp.lt.s32.totalorder %s38, 0
        %s570 = scalar_select %p569, %s38, 0
        %s571 = sadd.s32 %s570, %s568
        %s572 = smul.addr %s571, 8
        %s573 = scalar_lea.vmem %s0, %s572
        %p574 = pneg %p68
        %p575 = pneg %p65
        %p576 = scmp.lt.s32.totalorder %s37, 1
        %s577 = scalar_select %p576, %s37, 1
        %s578 = smul.addr %s577, 8
        %s579 = scalar_lea.vmem %s1, %s578
        %p580 = pneg %p94
        %p581 = pneg %p91
        %p582 = pneg %p115
        %p583 = pneg %p112
        %p584 = pneg %p136
        %p585 = pneg %p133
        %p586 = pneg %p157
        %p587 = pneg %p154
        %p588 = pneg %p178
        %p589 = pneg %p175
        %p590 = pneg %p199
        %p591 = pneg %p196
        %p592 = pneg %p220
        %p593 = pneg %p217
        %p594 = pneg %p241
        %p595 = pneg %p238
        %p596 = pneg %p262
        %p597 = pneg %p259
        %p598 = pneg %p283
        %p599 = pneg %p280
        %p600 = pneg %p304
        %p601 = pneg %p301
        %p602 = pneg %p325
        %p603 = pneg %p322
        %p604 = pneg %p346
        %p605 = pneg %p343
        %p606 = pneg %p367
        %p607 = pneg %p364
        %p608 = pneg %p388
        %p609 = pneg %p385
        %p610 = pneg %p416
        %p611 = pneg %p413
        %s612 = sand.u32 %s403, 1
        %s613 = scalar_lea.sflag [#allocation8], %s612
        %s614 = sand.u32 %s403, 1
        %s615 = smul.addr %s614, 8
        %s616 = scalar_lea.vmem [#allocation15], %s615
        %p617 = scmp.lt.s32.totalorder %s37, 1
        %s618 = scalar_select %p617, %s37, 1
        %p619 = scmp.lt.s32.totalorder %s38, 0
        %s620 = scalar_select %p619, %s38, 0
        %s621 = sadd.s32 %s620, %s618
        %s622 = smul.addr %s621, 8
        %s623 = scalar_lea.vmem %s0, %s622
        %p624 = scmp.lt.s32.totalorder %s37, 1
        %s625 = scalar_select %p624, %s37, 1
        %s626 = smul.addr %s625, 8
        %s627 = scalar_lea.vmem %s1, %s626
        %p629 = scmp.eq.s32.totalorder %s38, 0
        // Predicated region
        $region105: #{tpu_custom_call.1} parent=83 // pred_check
          %p630 = pneg %p629
        $region106: #{tpu_custom_call.1} parent=83 // pred_check_branch
          %632 = sbr.rel (%p630) target = $region108
        $region107: #{tpu_custom_call.1} parent=83 // pred_region
          %v633 = vld [vmem:[%s627] sm:$0xff]
          %v634 = vpack.c.bf16 %v633, %v633
          %v635 = vld [vmem:[#allocation6] sm:$0xf]
          %v636 = vld [vmem:[#allocation6 + $0x4] sm:$0xf]
          %v637 = vld [vmem:[#allocation6 + $0x8] sm:$0xf]
          %v638 = vld [vmem:[#allocation6 + $0xc] sm:$0xf]
          %v639 = vld [vmem:[%s7] sm:$0x1]
          %v641 = vlaneseq
          %v642 = vshrl.u32 %v641, 7
          %v643 = vsub.s32 0, %v642
          %v644 = vrot.slane %v639, %v643
          %v650 = vunpack.c.l.b16 %v635
          %v651 = vunpack.c.l.b16 %v636
          %v652 = vunpack.c.l.b16 %v637
          %v653 = vunpack.c.l.b16 %v638
          %v654 = vpack.c.b16 %v651, %v650
          %v655 = vpack.c.b16 %v653, %v652
          %vm658 = vcmask 261120
          %v660 = vsel %vm658, %v634, 0
          %662 = vmatprep.subr.bf16.mxu0 0
          %663 = vmatpush1.bf16.msra.mxu0 %v654
          %664 = vmatprep.subr.bf16.mxu0 0
          %665 = vmatpush1.bf16.msra.mxu0 %v655
          %666 = vmatprep.subr.bf16.mxu0 0
          %667 = vmatpush1.bf16.msra.mxu0 0
          %668 = vmatprep.subr.bf16.mxu0 0
          %669 = vmatpush1.bf16.msra.mxu0 0
          %670 = vmatprep.subr.bf16.mxu0 0
          %671 = vmatpush1.bf16.msra.mxu0 0
          %672 = vmatprep.subr.bf16.mxu0 0
          %673 = vmatpush1.bf16.msra.mxu0 0
          %674 = vmatprep.subr.bf16.mxu0 0
          %675 = vmatpush1.bf16.msra.mxu0 0
          %676 = vmatprep.subr.bf16.mxu0 0
          %677 = vmatpush1.bf16.msra.mxu0 0
          %678 = vmatprep.subr.bf16.mxu0 0
          %679 = vmatpush1.bf16.msra.mxu0 0
          %680 = vmatprep.subr.bf16.mxu0 0
          %681 = vmatpush1.bf16.msra.mxu0 0
          %682 = vmatprep.subr.bf16.mxu0 0
          %683 = vmatpush1.bf16.msra.mxu0 0
          %684 = vmatprep.subr.bf16.mxu0 0
          %685 = vmatpush1.bf16.msra.mxu0 0
          %686 = vmatprep.subr.bf16.mxu0 0
          %687 = vmatpush1.bf16.msra.mxu0 0
          %688 = vmatprep.subr.bf16.mxu0 0
          %689 = vmatpush1.bf16.msra.mxu0 0
          %690 = vmatprep.subr.bf16.mxu0 0
          %691 = vmatpush1.bf16.msra.mxu0 0
          %692 = vmatprep.subr.bf16.mxu0 0
          %693 = vmatpush1.bf16.msra.mxu0 0
          %694 = vmatprep.mubr.bf16.mxu0 0
          %695 = vmatmul.mubr.bf16.gmra.mrb[0].mxu0 %v660
          %v696 = vpop.f32.mrb[0].mxu0
          %v697 = vadd.f32 %v644, %v696
          %v698 = vpop.f32.mrb[0].mxu0
          %v699 = vpop.f32.mrb[0].mxu0
          %v700 = vpop.f32.mrb[0].mxu0
          %701 = vdwg.mxu0
          %v702 = vld [vmem:[#allocation9] sm:$0xf]
          %v703 = vld [vmem:[#allocation9 + $0x4] sm:$0xf]
          %v704 = vld [vmem:[#allocation9 + $0x8] sm:$0xf]
          %v705 = vld [vmem:[#allocation9 + $0xc] sm:$0xf]
          %v706 = vld [vmem:[#allocation12] sm:$0x1]
          %v708 = vlaneseq
          %v709 = vshrl.u32 %v708, 7
          %v710 = vsub.s32 0, %v709
          %v711 = vrot.slane %v706, %v710
          %v717 = vunpack.c.l.b16 %v702
          %v718 = vunpack.c.l.b16 %v703
          %v719 = vunpack.c.l.b16 %v704
          %v720 = vunpack.c.l.b16 %v705
          %v721 = vpack.c.b16 %v718, %v717
          %v722 = vpack.c.b16 %v720, %v719
          %725 = vmatprep.subr.bf16.mxu0 0
          %726 = vmatpush1.bf16.msra.mxu0 %v721
          %727 = vmatprep.subr.bf16.mxu0 0
          %728 = vmatpush1.bf16.msra.mxu0 %v722
          %729 = vmatprep.subr.bf16.mxu0 0
          %730 = vmatpush1.bf16.msra.mxu0 0
          %731 = vmatprep.subr.bf16.mxu0 0
          %732 = vmatpush1.bf16.msra.mxu0 0
          %733 = vmatprep.subr.bf16.mxu0 0
          %734 = vmatpush1.bf16.msra.mxu0 0
          %735 = vmatprep.subr.bf16.mxu0 0
          %736 = vmatpush1.bf16.msra.mxu0 0
          %737 = vmatprep.subr.bf16.mxu0 0
          %738 = vmatpush1.bf16.msra.mxu0 0
          %739 = vmatprep.subr.bf16.mxu0 0
          %740 = vmatpush1.bf16.msra.mxu0 0
          %741 = vmatprep.subr.bf16.mxu0 0
          %742 = vmatpush1.bf16.msra.mxu0 0
          %743 = vmatprep.subr.bf16.mxu0 0
          %744 = vmatpush1.bf16.msra.mxu0 0
          %745 = vmatprep.subr.bf16.mxu0 0
          %746 = vmatpush1.bf16.msra.mxu0 0
          %747 = vmatprep.subr.bf16.mxu0 0
          %748 = vmatpush1.bf16.msra.mxu0 0
          %749 = vmatprep.subr.bf16.mxu0 0
          %750 = vmatpush1.bf16.msra.mxu0 0
          %751 = vmatprep.subr.bf16.mxu0 0
          %752 = vmatpush1.bf16.msra.mxu0 0
          %753 = vmatprep.subr.bf16.mxu0 0
          %754 = vmatpush1.bf16.msra.mxu0 0
          %755 = vmatprep.subr.bf16.mxu0 0
          %756 = vmatpush1.bf16.msra.mxu0 0
          %757 = vmatprep.mubr.bf16.mxu0 0
          %758 = vmatmul.mubr.bf16.gmra.mrb[0].mxu0 %v660
          %v759 = vpop.f32.mrb[0].mxu0
          %v760 = vadd.f32 %v711, %v759
          %v761 = vpop.f32.mrb[0].mxu0
          %v762 = vpop.f32.mrb[0].mxu0
          %v763 = vpop.f32.mrb[0].mxu0
          %764 = vdwg.mxu0
          %v765 = vpack.c.bf16 %v697, %v697
          %vm766 = vcmask 257024
          %767 = vst.msk [vmem:[#allocation3] sm:$0xf] %vm766, %v765
          %v768 = vpack.c.bf16 %v760, %v760
          %769 = vst.msk [vmem:[#allocation4] sm:$0xf] %vm766, %v768
        $region108: #{tpu_custom_call.1} parent=83 // pred_fallthru
          _
        %v770 = vld [vmem:[%s623] sm:$0xff]
        %v771 = vpack.c.bf16 %v770, %v770
        %v772 = vld [vmem:[%s2] sm:$0xf]
        %v773 = vld [vmem:[%s2 + $0x4] sm:$0xf]
        %v774 = vld [vmem:[%s2 + $0x8] sm:$0xf]
        %v775 = vld [vmem:[%s2 + $0xc] sm:$0xf]
        %v776 = vld [vmem:[%s6] sm:$0x1]
        %v778 = vlaneseq
        %v779 = vshrl.u32 %v778, 7
        %v780 = vsub.s32 0, %v779
        %v781 = vrot.slane %v776, %v780
        %v787 = vunpack.c.l.b16 %v772
        %v788 = vunpack.c.l.b16 %v773
        %v789 = vunpack.c.l.b16 %v774
        %v790 = vunpack.c.l.b16 %v775
        %v791 = vpack.c.b16 %v788, %v787
        %v792 = vpack.c.b16 %v790, %v789
        %vm795 = vcmask 261120
        %v797 = vsel %vm795, %v771, 0
        %799 = vmatprep.subr.bf16.mxu0 0
        %800 = vmatpush1.bf16.msra.mxu0 %v791
        %801 = vmatprep.subr.bf16.mxu0 0
        %802 = vmatpush1.bf16.msra.mxu0 %v792
        %803 = vmatprep.subr.bf16.mxu0 0
        %804 = vmatpush1.bf16.msra.mxu0 0
        %805 = vmatprep.subr.bf16.mxu0 0
        %806 = vmatpush1.bf16.msra.mxu0 0
        %807 = vmatprep.subr.bf16.mxu0 0
        %808 = vmatpush1.bf16.msra.mxu0 0
        %809 = vmatprep.subr.bf16.mxu0 0
        %810 = vmatpush1.bf16.msra.mxu0 0
        %811 = vmatprep.subr.bf16.mxu0 0
        %812 = vmatpush1.bf16.msra.mxu0 0
        %813 = vmatprep.subr.bf16.mxu0 0
        %814 = vmatpush1.bf16.msra.mxu0 0
        %815 = vmatprep.subr.bf16.mxu0 0
        %816 = vmatpush1.bf16.msra.mxu0 0
        %817 = vmatprep.subr.bf16.mxu0 0
        %818 = vmatpush1.bf16.msra.mxu0 0
        %819 = vmatprep.subr.bf16.mxu0 0
        %820 = vmatpush1.bf16.msra.mxu0 0
        %821 = vmatprep.subr.bf16.mxu0 0
        %822 = vmatpush1.bf16.msra.mxu0 0
        %823 = vmatprep.subr.bf16.mxu0 0
        %824 = vmatpush1.bf16.msra.mxu0 0
        %825 = vmatprep.subr.bf16.mxu0 0
        %826 = vmatpush1.bf16.msra.mxu0 0
        %827 = vmatprep.subr.bf16.mxu0 0
        %828 = vmatpush1.bf16.msra.mxu0 0
        %829 = vmatprep.subr.bf16.mxu0 0
        %830 = vmatpush1.bf16.msra.mxu0 0
        %831 = vmatprep.mubr.bf16.mxu0 0
        %832 = vmatmul.mubr.bf16.gmra.mrb[0].mxu0 %v797
        %v833 = vpop.f32.mrb[0].mxu0
        %v834 = vadd.f32 %v781, %v833
        %v835 = vpop.f32.mrb[0].mxu0
        %v836 = vpop.f32.mrb[0].mxu0
        %v837 = vpop.f32.mrb[0].mxu0
        %838 = vdwg.mxu0
        %v839 = vmul.f32 %v834, 0.35355338
        %v840 = vpack.c.bf16 %v839, %v839
        %vm841 = vcmask 257024
        %842 = vst.msk [vmem:[#allocation2] sm:$0xf] %vm841, %v840
        %v843 = vld [vmem:[#allocation2] sm:$0xf]
        %v844 = vld [vmem:[#allocation3] sm:$0xf]
        %vm845 = vcmask 64512
        %v847 = vsel %vm845, %v843, 0
        %v850 = vsel %vm845, %v844, 0
        %852 = vmatprep.subr.bf16.mxu0 0
        %853 = vmatpush1.bf16.xpose.msra.mxu0 %v850
        %854 = vmatprep.subr.bf16.mxu0 0
        %855 = vmatpush1.bf16.xpose.msra.mxu0 0
        %856 = vmatprep.subr.bf16.mxu0 0
        %857 = vmatpush1.bf16.xpose.msra.mxu0 0
        %858 = vmatprep.subr.bf16.mxu0 0
        %859 = vmatpush1.bf16.xpose.msra.mxu0 0
        %860 = vmatprep.subr.bf16.mxu0 0
        %861 = vmatpush1.bf16.xpose.msra.mxu0 0
        %862 = vmatprep.subr.bf16.mxu0 0
        %863 = vmatpush1.bf16.xpose.msra.mxu0 0
        %864 = vmatprep.subr.bf16.mxu0 0
        %865 = vmatpush1.bf16.xpose.msra.mxu0 0
        %866 = vmatprep.subr.bf16.mxu0 0
        %867 = vmatpush1.bf16.xpose.msra.mxu0 0
        %868 = vmatprep.subr.bf16.mxu0 0
        %869 = vmatpush1.bf16.xpose.msra.mxu0 0
        %870 = vmatprep.subr.bf16.mxu0 0
        %871 = vmatpush1.bf16.xpose.msra.mxu0 0
        %872 = vmatprep.subr.bf16.mxu0 0
        %873 = vmatpush1.bf16.xpose.msra.mxu0 0
        %874 = vmatprep.subr.bf16.mxu0 0
        %875 = vmatpush1.bf16.xpose.msra.mxu0 0
        %876 = vmatprep.subr.bf16.mxu0 0
        %877 = vmatpush1.bf16.xpose.msra.mxu0 0
        %878 = vmatprep.subr.bf16.mxu0 0
        %879 = vmatpush1.bf16.xpose.msra.mxu0 0
        %880 = vmatprep.subr.bf16.mxu0 0
        %881 = vmatpush1.bf16.xpose.msra.mxu0 0
        %882 = vmatprep.subr.bf16.mxu0 0
        %883 = vmatpush1.bf16.xpose.msra.mxu0 0
        %884 = vmatprep.mubr.bf16.mxu0 0
        %885 = vmatmul.mubr.bf16.gmra.mrb[0].mxu0 %v847
        %v886 = vpop.f32.mrb[0].mxu0
        %v887 = vadd.f32 0.0, %v886
        %v888 = vpop.f32.mrb[0].mxu0
        %v889 = vpop.f32.mrb[0].mxu0
        %v890 = vpop.f32.mrb[0].mxu0
        %891 = vdwg.mxu0
        %v892 = vsel %vm845, %v887, -inf
        %893 = vmax.xlane.f32.xlu0 %v892
        %v894 = vpop.xlane.xlu0 %893
        %v895 = vsub.f32 %v887, %v894
        %v896 = vmul.f32 %v895, 1.442695
        %v897 = vpow.pop %v896
        %v898 = vsel %vm845, %v897, 0.0
        %899 = vadd.xlane.f32.xlu0 %v898
        %v900 = vpop.xlane.xlu0 %899
        %v901 = vrcp.pop %v900
        %v902 = vpack.c.bf16 %v897, %v897
        %v903 = vld [vmem:[#allocation4] sm:$0xf]
        %v905 = vsel %vm845, %v902, 0
        %vm907 = vcmask 1043456
        %v909 = vsel %vm907, %v903, 0
        %911 = vmatprep.subr.bf16.mxu0 0
        %912 = vmatpush1.bf16.msra.mxu0 %v909
        %913 = vmatprep.subr.bf16.mxu0 0
        %914 = vmatpush1.bf16.msra.mxu0 0
        %915 = vmatprep.subr.bf16.mxu0 0
        %916 = vmatpush1.bf16.msra.mxu0 0
        %917 = vmatprep.subr.bf16.mxu0 0
        %918 = vmatpush1.bf16.msra.mxu0 0
        %919 = vmatprep.subr.bf16.mxu0 0
        %920 = vmatpush1.bf16.msra.mxu0 0
        %921 = vmatprep.subr.bf16.mxu0 0
        %922 = vmatpush1.bf16.msra.mxu0 0
        %923 = vmatprep.subr.bf16.mxu0 0
        %924 = vmatpush1.bf16.msra.mxu0 0
        %925 = vmatprep.subr.bf16.mxu0 0
        %926 = vmatpush1.bf16.msra.mxu0 0
        %927 = vmatprep.subr.bf16.mxu0 0
        %928 = vmatpush1.bf16.msra.mxu0 0
        %929 = vmatprep.subr.bf16.mxu0 0
        %930 = vmatpush1.bf16.msra.mxu0 0
        %931 = vmatprep.subr.bf16.mxu0 0
        %932 = vmatpush1.bf16.msra.mxu0 0
        %933 = vmatprep.subr.bf16.mxu0 0
        %934 = vmatpush1.bf16.msra.mxu0 0
        %935 = vmatprep.subr.bf16.mxu0 0
        %936 = vmatpush1.bf16.msra.mxu0 0
        %937 = vmatprep.subr.bf16.mxu0 0
        %938 = vmatpush1.bf16.msra.mxu0 0
        %939 = vmatprep.subr.bf16.mxu0 0
        %940 = vmatpush1.bf16.msra.mxu0 0
        %941 = vmatprep.subr.bf16.mxu0 0
        %942 = vmatpush1.bf16.msra.mxu0 0
        %943 = vmatprep.mubr.bf16.mxu0 0
        %944 = vmatmul.mubr.bf16.gmra.mrb[0].mxu0 %v905
        %v945 = vpop.f32.mrb[0].mxu0
        %v946 = vadd.f32 0.0, %v945
        %v947 = vpop.f32.mrb[0].mxu0
        %v948 = vpop.f32.mrb[0].mxu0
        %v949 = vpop.f32.mrb[0].mxu0
        %950 = vdwg.mxu0
        %v951 = vmul.f32 %v946, %v901
        %v952 = vpack.c.bf16 %v951, %v951
        %vm953 = vcmask 60416
        %954 = vst.msk [vmem:[#allocation5] sm:$0xf] %vm953, %v952
        %v955 = vld [vmem:[#allocation2] sm:$0xf]
        %v956 = vld [vmem:[#allocation3] sm:$0xf]
        %v958 = vunpack.c.l.b16 %v955
        %v959 = vpack.c.b16 %v958, %v958
        %960 = vrot.lane.b32.xlu0 %v959, 120
        %v961 = vpop.permute.xlu0 %960
        %v963 = vunpack.c.l.b16 %v956
        %v964 = vpack.c.b16 %v963, %v963
        %965 = vrot.lane.b32.xlu0 %v964, 120
        %v966 = vpop.permute.xlu0 %965
        %v968 = vsel %vm845, %v961, 0
        %v971 = vsel %vm845, %v966, 0
        %973 = vmatprep.subr.bf16.mxu0 0
        %974 = vmatpush1.bf16.xpose.msra.mxu0 %v971
        %975 = vmatprep.subr.bf16.mxu0 0
        %976 = vmatpush1.bf16.xpose.msra.mxu0 0
        %977 = vmatprep.subr.bf16.mxu0 0
        %978 = vmatpush1.bf16.xpose.msra.mxu0 0
        %979 = vmatprep.subr.bf16.mxu0 0
        %980 = vmatpush1.bf16.xpose.msra.mxu0 0
        %981 = vmatprep.subr.bf16.mxu0 0
        %982 = vmatpush1.bf16.xpose.msra.mxu0 0
        %983 = vmatprep.subr.bf16.mxu0 0
        %984 = vmatpush1.bf16.xpose.msra.mxu0 0
        %985 = vmatprep.subr.bf16.mxu0 0
        %986 = vmatpush1.bf16.xpose.msra.mxu0 0
        %987 = vmatprep.subr.bf16.mxu0 0
        %988 = vmatpush1.bf16.xpose.msra.mxu0 0
        %989 = vmatprep.subr.bf16.mxu0 0
        %990 = vmatpush1.bf16.xpose.msra.mxu0 0
        %991 = vmatprep.subr.bf16.mxu0 0
        %992 = vmatpush1.bf16.xpose.msra.mxu0 0
        %993 = vmatprep.subr.bf16.mxu0 0
        %994 = vmatpush1.bf16.xpose.msra.mxu0 0
        %995 = vmatprep.subr.bf16.mxu0 0
        %996 = vmatpush1.bf16.xpose.msra.mxu0 0
        %997 = vmatprep.subr.bf16.mxu0 0
        %998 = vmatpush1.bf16.xpose.msra.mxu0 0
        %999 = vmatprep.subr.bf16.mxu0 0
        %1000 = vmatpush1.bf16.xpose.msra.mxu0 0
        %1001 = vmatprep.subr.bf16.mxu0 0
        %1002 = vmatpush1.bf16.xpose.msra.mxu0 0
        %1003 = vmatprep.subr.bf16.mxu0 0
        %1004 = vmatpush1.bf16.xpose.msra.mxu0 0
        %1005 = vmatprep.mubr.bf16.mxu0 0
        %1006 = vmatmul.mubr.bf16.gmra.mrb[0].mxu0 %v968
        %v1007 = vpop.f32.mrb[0].mxu0
        %v1008 = vadd.f32 0.0, %v1007
        %v1009 = vpop.f32.mrb[0].mxu0
        %v1010 = vpop.f32.mrb[0].mxu0
        %v1011 = vpop.f32.mrb[0].mxu0
        %1012 = vdwg.mxu0
        %v1013 = vsel %vm845, %v1008, -inf
        %1014 = vmax.xlane.f32.xlu0 %v1013
        %v1015 = vpop.xlane.xlu0 %1014
        %v1016 = vsub.f32 %v1008, %v1015
        %v1017 = vmul.f32 %v1016, 1.442695
        %v1018 = vpow.pop %v1017
        %v1019 = vsel %vm845, %v1018, 0.0
        %1020 = vadd.xlane.f32.xlu0 %v1019
        %v1021 = vpop.xlane.xlu0 %1020
        %v1022 = vrcp.pop %v1021
        %v1023 = vpack.c.bf16 %v1018, %v1018
        %v1024 = vld [vmem:[#allocation4] sm:$0xf]
        %v1026 = vunpack.c.l.b16 %v1024
        %v1027 = vpack.c.b16 %v1026, %v1026
        %1028 = vrot.lane.b32.xlu0 %v1027, 120
        %v1029 = vpop.permute.xlu0 %1028
        %v1031 = vsel %vm845, %v1023, 0
        %v1034 = vsel %vm907, %v1029, 0
        %1036 = vmatprep.subr.bf16.mxu0 0
        %1037 = vmatpush1.bf16.msra.mxu0 %v1034
        %1038 = vmatprep.subr.bf16.mxu0 0
        %1039 = vmatpush1.bf16.msra.mxu0 0
        %1040 = vmatprep.subr.bf16.mxu0 0
        %1041 = vmatpush1.bf16.msra.mxu0 0
        %1042 = vmatprep.subr.bf16.mxu0 0
        %1043 = vmatpush1.bf16.msra.mxu0 0
        %1044 = vmatprep.subr.bf16.mxu0 0
        %1045 = vmatpush1.bf16.msra.mxu0 0
        %1046 = vmatprep.subr.bf16.mxu0 0
        %1047 = vmatpush1.bf16.msra.mxu0 0
        %1048 = vmatprep.subr.bf16.mxu0 0
        %1049 = vmatpush1.bf16.msra.mxu0 0
        %1050 = vmatprep.subr.bf16.mxu0 0
        %1051 = vmatpush1.bf16.msra.mxu0 0
        %1052 = vmatprep.subr.bf16.mxu0 0
        %1053 = vmatpush1.bf16.msra.mxu0 0
        %1054 = vmatprep.subr.bf16.mxu0 0
        %1055 = vmatpush1.bf16.msra.mxu0 0
        %1056 = vmatprep.subr.bf16.mxu0 0
        %1057 = vmatpush1.bf16.msra.mxu0 0
        %1058 = vmatprep.subr.bf16.mxu0 0
        %1059 = vmatpush1.bf16.msra.mxu0 0
        %1060 = vmatprep.subr.bf16.mxu0 0
        %1061 = vmatpush1.bf16.msra.mxu0 0
        %1062 = vmatprep.subr.bf16.mxu0 0
        %1063 = vmatpush1.bf16.msra.mxu0 0
        %1064 = vmatprep.subr.bf16.mxu0 0
        %1065 = vmatpush1.bf16.msra.mxu0 0
        %1066 = vmatprep.subr.bf16.mxu0 0
        %1067 = vmatpush1.bf16.msra.mxu0 0
        %1068 = vmatprep.mubr.bf16.mxu0 0
        %1069 = vmatmul.mubr.bf16.gmra.mrb[0].mxu0 %v1031
        %v1070 = vpop.f32.mrb[0].mxu0
        %v1071 = vadd.f32 0.0, %v1070
        %v1072 = vpop.f32.mrb[0].mxu0
        %v1073 = vpop.f32.mrb[0].mxu0
        %v1074 = vpop.f32.mrb[0].mxu0
        %1075 = vdwg.mxu0
        %v1076 = vmul.f32 %v1071, %v1022
        %v1077 = vpack.c.bf16 %v1076, %v1076
        %v1079 = vunpack.c.l.b16 %v1077
        %v1080 = vpack.c.b16 %v1079, %v1079
        %1081 = vrot.lane.b32.xlu0 %v1080, 8
        %v1082 = vpop.permute.xlu0 %1081
        %vm1084 = vcmask 126016
        %1085 = vst.msk [vmem:[#allocation5] sm:$0xf] %vm1084, %v1082
        %v1086 = vld [vmem:[#allocation2] sm:$0xf]
        %v1087 = vld [vmem:[#allocation3] sm:$0xf]
        %v1089 = vunpack.c.l.b16 %v1086
        %v1090 = vpack.c.b16 %v1089, %v1089
        %1091 = vrot.lane.b32.xlu0 %v1090, 112
        %v1092 = vpop.permute.xlu0 %1091
        %v1094 = vunpack.c.l.b16 %v1087
        %v1095 = vpack.c.b16 %v1094, %v1094
        %1096 = vrot.lane.b32.xlu0 %v1095, 112
        %v1097 = vpop.permute.xlu0 %1096
        %v1099 = vsel %vm845, %v1092, 0
        %v1102 = vsel %vm845, %v1097, 0
        %1104 = vmatprep.subr.bf16.mxu0 0
        %1105 = vmatpush1.bf16.xpose.msra.mxu0 %v1102
        %1106 = vmatprep.subr.bf16.mxu0 0
        %1107 = vmatpush1.bf16.xpose.msra.mxu0 0
        %1108 = vmatprep.subr.bf16.mxu0 0
        %1109 = vmatpush1.bf16.xpose.msra.mxu0 0
        %1110 = vmatprep.subr.bf16.mxu0 0
        %1111 = vmatpush1.bf16.xpose.msra.mxu0 0
        %1112 = vmatprep.subr.bf16.mxu0 0
        %1113 = vmatpush1.bf16.xpose.msra.mxu0 0
        %1114 = vmatprep.subr.bf16.mxu0 0
        %1115 = vmatpush1.bf16.xpose.msra.mxu0 0
        %1116 = vmatprep.subr.bf16.mxu0 0
        %1117 = vmatpush1.bf16.xpose.msra.mxu0 0
        %1118 = vmatprep.subr.bf16.mxu0 0
        %1119 = vmatpush1.bf16.xpose.msra.mxu0 0
        %1120 = vmatprep.subr.bf16.mxu0 0
        %1121 = vmatpush1.bf16.xpose.msra.mxu0 0
        %1122 = vmatprep.subr.bf16.mxu0 0
        %1123 = vmatpush1.bf16.xpose.msra.mxu0 0
        %1124 = vmatprep.subr.bf16.mxu0 0
        %1125 = vmatpush1.bf16.xpose.msra.mxu0 0
        %1126 = vmatprep.subr.bf16.mxu0 0
        %1127 = vmatpush1.bf16.xpose.msra.mxu0 0
        %1128 = vmatprep.subr.bf16.mxu0 0
        %1129 = vmatpush1.bf16.xpose.msra.mxu0 0
        %1130 = vmatprep.subr.bf16.mxu0 0
        %1131 = vmatpush1.bf16.xpose.msra.mxu0 0
        %1132 = vmatprep.subr.bf16.mxu0 0
        %1133 = vmatpush1.bf16.xpose.msra.mxu0 0
        %1134 = vmatprep.subr.bf16.mxu0 0
        %1135 = vmatpush1.bf16.xpose.msra.mxu0 0
        %1136 = vmatprep.mubr.bf16.mxu0 0
        %1137 = vmatmul.mubr.bf16.gmra.mrb[0].mxu0 %v1099
        %v1138 = vpop.f32.mrb[0].mxu0
        %v1139 = vadd.f32 0.0, %v1138
        %v1140 = vpop.f32.mrb[0].mxu0
        %v1141 = vpop.f32.mrb[0].mxu0
        %v1142 = vpop.f32.mrb[0].mxu0
        %1143 = vdwg.mxu0
        %v1144 = vsel %vm845, %v1139, -inf
        %1145 = vmax.xlane.f32.xlu0 %v1144
        %v1146 = vpop.xlane.xlu0 %1145
        %v1147 = vsub.f32 %v1139, %v1146
        %v1148 = vmul.f32 %v1147, 1.442695
        %v1149 = vpow.pop %v1148
        %v1150 = vsel %vm845, %v1149, 0.0
        %1151 = vadd.xlane.f32.xlu0 %v1150
        %v1152 = vpop.xlane.xlu0 %1151
        %v1153 = vrcp.pop %v1152
        %v1154 = vpack.c.bf16 %v1149, %v1149
        %v1155 = vld [vmem:[#allocation4] sm:$0xf]
        %v1157 = vunpack.c.l.b16 %v1155
        %v1158 = vpack.c.b16 %v1157, %v1157
        %1159 = vrot.lane.b32.xlu0 %v1158, 112
        %v1160 = vpop.permute.xlu0 %1159
        %v1162 = vsel %vm845, %v1154, 0
        %v1165 = vsel %vm907, %v1160, 0
        %1167 = vmatprep.subr.bf16.mxu0 0
        %1168 = vmatpush1.bf16.msra.mxu0 %v1165
        %1169 = vmatprep.subr.bf16.mxu0 0
        %1170 = vmatpush1.bf16.msra.mxu0 0
        %1171 = vmatprep.subr.bf16.mxu0 0
        %1172 = vmatpush1.bf16.msra.mxu0 0
        %1173 = vmatprep.subr.bf16.mxu0 0
        %1174 = vmatpush1.bf16.msra.mxu0 0
        %1175 = vmatprep.subr.bf16.mxu0 0
        %1176 = vmatpush1.bf16.msra.mxu0 0
        %1177 = vmatprep.subr.bf16.mxu0 0
        %1178 = vmatpush1.bf16.msra.mxu0 0
        %1179 = vmatprep.subr.bf16.mxu0 0
        %1180 = vmatpush1.bf16.msra.mxu0 0
        %1181 = vmatprep.subr.bf16.mxu0 0
        %1182 = vmatpush1.bf16.msra.mxu0 0
        %1183 = vmatprep.subr.bf16.mxu0 0
        %1184 = vmatpush1.bf16.msra.mxu0 0
        %1185 = vmatprep.subr.bf16.mxu0 0
        %1186 = vmatpush1.bf16.msra.mxu0 0
        %1187 = vmatprep.subr.bf16.mxu0 0
        %1188 = vmatpush1.bf16.msra.mxu0 0
        %1189 = vmatprep.subr.bf16.mxu0 0
        %1190 = vmatpush1.bf16.msra.mxu0 0
        %1191 = vmatprep.subr.bf16.mxu0 0
        %1192 = vmatpush1.bf16.msra.mxu0 0
        %1193 = vmatprep.subr.bf16.mxu0 0
        %1194 = vmatpush1.bf16.msra.mxu0 0
        %1195 = vmatprep.subr.bf16.mxu0 0
        %1196 = vmatpush1.bf16.msra.mxu0 0
        %1197 = vmatprep.subr.bf16.mxu0 0
        %1198 = vmatpush1.bf16.msra.mxu0 0
        %1199 = vmatprep.mubr.bf16.mxu0 0
        %1200 = vmatmul.mubr.bf16.gmra.mrb[0].mxu0 %v1162
        %v1201 = vpop.f32.mrb[0].mxu0
        %v1202 = vadd.f32 0.0, %v1201
        %v1203 = vpop.f32.mrb[0].mxu0
        %v1204 = vpop.f32.mrb[0].mxu0
        %v1205 = vpop.f32.mrb[0].mxu0
        %1206 = vdwg.mxu0
        %v1207 = vmul.f32 %v1202, %v1153
        %v1208 = vpack.c.bf16 %v1207, %v1207
        %v1210 = vunpack.c.l.b16 %v1208
        %v1211 = vpack.c.b16 %v1210, %v1210
        %1212 = vrot.lane.b32.xlu0 %v1211, 16
        %v1213 = vpop.permute.xlu0 %1212
        %vm1215 = vcmask 191616
        %1216 = vst.msk [vmem:[#allocation5] sm:$0xf] %vm1215, %v1213
        %v1217 = vld [vmem:[#allocation2] sm:$0xf]
        %v1218 = vld [vmem:[#allocation3] sm:$0xf]
        %v1220 = vunpack.c.l.b16 %v1217
        %v1221 = vpack.c.b16 %v1220, %v1220
        %1222 = vrot.lane.b32.xlu0 %v1221, 104
        %v1223 = vpop.permute.xlu0 %1222
        %v1225 = vunpack.c.l.b16 %v1218
        %v1226 = vpack.c.b16 %v1225, %v1225
        %1227 = vrot.lane.b32.xlu0 %v1226, 104
        %v1228 = vpop.permute.xlu0 %1227
        %v1230 = vsel %vm845, %v1223, 0
        %v1233 = vsel %vm845, %v1228, 0
        %1235 = vmatprep.subr.bf16.mxu0 0
        %1236 = vmatpush1.bf16.xpose.msra.mxu0 %v1233
        %1237 = vmatprep.subr.bf16.mxu0 0
        %1238 = vmatpush1.bf16.xpose.msra.mxu0 0
        %1239 = vmatprep.subr.bf16.mxu0 0
        %1240 = vmatpush1.bf16.xpose.msra.mxu0 0
        %1241 = vmatprep.subr.bf16.mxu0 0
        %1242 = vmatpush1.bf16.xpose.msra.mxu0 0
        %1243 = vmatprep.subr.bf16.mxu0 0
        %1244 = vmatpush1.bf16.xpose.msra.mxu0 0
        %1245 = vmatprep.subr.bf16.mxu0 0
        %1246 = vmatpush1.bf16.xpose.msra.mxu0 0
        %1247 = vmatprep.subr.bf16.mxu0 0
        %1248 = vmatpush1.bf16.xpose.msra.mxu0 0
        %1249 = vmatprep.subr.bf16.mxu0 0
        %1250 = vmatpush1.bf16.xpose.msra.mxu0 0
        %1251 = vmatprep.subr.bf16.mxu0 0
        %1252 = vmatpush1.bf16.xpose.msra.mxu0 0
        %1253 = vmatprep.subr.bf16.mxu0 0
        %1254 = vmatpush1.bf16.xpose.msra.mxu0 0
        %1255 = vmatprep.subr.bf16.mxu0 0
        %1256 = vmatpush1.bf16.xpose.msra.mxu0 0
        %1257 = vmatprep.subr.bf16.mxu0 0
        %1258 = vmatpush1.bf16.xpose.msra.mxu0 0
        %1259 = vmatprep.subr.bf16.mxu0 0
        %1260 = vmatpush1.bf16.xpose.msra.mxu0 0
        %1261 = vmatprep.subr.bf16.mxu0 0
        %1262 = vmatpush1.bf16.xpose.msra.mxu0 0
        %1263 = vmatprep.subr.bf16.mxu0 0
        %1264 = vmatpush1.bf16.xpose.msra.mxu0 0
        %1265 = vmatprep.subr.bf16.mxu0 0
        %1266 = vmatpush1.bf16.xpose.msra.mxu0 0
        %1267 = vmatprep.mubr.bf16.mxu0 0
        %1268 = vmatmul.mubr.bf16.gmra.mrb[0].mxu0 %v1230
        %v1269 = vpop.f32.mrb[0].mxu0
        %v1270 = vadd.f32 0.0, %v1269
        %v1271 = vpop.f32.mrb[0].mxu0
        %v1272 = vpop.f32.mrb[0].mxu0
        %v1273 = vpop.f32.mrb[0].mxu0
        %1274 = vdwg.mxu0
        %v1275 = vsel %vm845, %v1270, -inf
        %1276 = vmax.xlane.f32.xlu0 %v1275
        %v1277 = vpop.xlane.xlu0 %1276
        %v1278 = vsub.f32 %v1270, %v1277
        %v1279 = vmul.f32 %v1278, 1.442695
        %v1280 = vpow.pop %v1279
        %v1281 = vsel %vm845, %v1280, 0.0
        %1282 = vadd.xlane.f32.xlu0 %v1281
        %v1283 = vpop.xlane.xlu0 %1282
        %v1284 = vrcp.pop %v1283
        %v1285 = vpack.c.bf16 %v1280, %v1280
        %v1286 = vld [vmem:[#allocation4] sm:$0xf]
        %v1288 = vunpack.c.l.b16 %v1286
        %v1289 = vpack.c.b16 %v1288, %v1288
        %1290 = vrot.lane.b32.xlu0 %v1289, 104
        %v1291 = vpop.permute.xlu0 %1290
        %v1293 = vsel %vm845, %v1285, 0
        %v1296 = vsel %vm907, %v1291, 0
        %1298 = vmatprep.subr.bf16.mxu0 0
        %1299 = vmatpush1.bf16.msra.mxu0 %v1296
        %1300 = vmatprep.subr.bf16.mxu0 0
        %1301 = vmatpush1.bf16.msra.mxu0 0
        %1302 = vmatprep.subr.bf16.mxu0 0
        %1303 = vmatpush1.bf16.msra.mxu0 0
        %1304 = vmatprep.subr.bf16.mxu0 0
        %1305 = vmatpush1.bf16.msra.mxu0 0
        %1306 = vmatprep.subr.bf16.mxu0 0
        %1307 = vmatpush1.bf16.msra.mxu0 0
        %1308 = vmatprep.subr.bf16.mxu0 0
        %1309 = vmatpush1.bf16.msra.mxu0 0
        %1310 = vmatprep.subr.bf16.mxu0 0
        %1311 = vmatpush1.bf16.msra.mxu0 0
        %1312 = vmatprep.subr.bf16.mxu0 0
        %1313 = vmatpush1.bf16.msra.mxu0 0
        %1314 = vmatprep.subr.bf16.mxu0 0
        %1315 = vmatpush1.bf16.msra.mxu0 0
        %1316 = vmatprep.subr.bf16.mxu0 0
        %1317 = vmatpush1.bf16.msra.mxu0 0
        %1318 = vmatprep.subr.bf16.mxu0 0
        %1319 = vmatpush1.bf16.msra.mxu0 0
        %1320 = vmatprep.subr.bf16.mxu0 0
        %1321 = vmatpush1.bf16.msra.mxu0 0
        %1322 = vmatprep.subr.bf16.mxu0 0
        %1323 = vmatpush1.bf16.msra.mxu0 0
        %1324 = vmatprep.subr.bf16.mxu0 0
        %1325 = vmatpush1.bf16.msra.mxu0 0
        %1326 = vmatprep.subr.bf16.mxu0 0
        %1327 = vmatpush1.bf16.msra.mxu0 0
        %1328 = vmatprep.subr.bf16.mxu0 0
        %1329 = vmatpush1.bf16.msra.mxu0 0
        %1330 = vmatprep.mubr.bf16.mxu0 0
        %1331 = vmatmul.mubr.bf16.gmra.mrb[0].mxu0 %v1293
        %v1332 = vpop.f32.mrb[0].mxu0
        %v1333 = vadd.f32 0.0, %v1332
        %v1334 = vpop.f32.mrb[0].mxu0
        %v1335 = vpop.f32.mrb[0].mxu0
        %v1336 = vpop.f32.mrb[0].mxu0
        %1337 = vdwg.mxu0
        %v1338 = vmul.f32 %v1333, %v1284
        %v1339 = vpack.c.bf16 %v1338, %v1338
        %v1341 = vunpack.c.l.b16 %v1339
        %v1342 = vpack.c.b16 %v1341, %v1341
        %1343 = vrot.lane.b32.xlu0 %v1342, 24
        %v1344 = vpop.permute.xlu0 %1343
        %vm1346 = vcmask 257216
        %1347 = vst.msk [vmem:[#allocation5] sm:$0xf] %vm1346, %v1344
        %v1348 = vld [vmem:[#allocation5] sm:$0xf]
        %v1349 = vld [vmem:[#allocation11] sm:$0xf]
        %v1350 = vld [vmem:[#allocation11 + $0x4] sm:$0xf]
        %v1351 = vld [vmem:[#allocation11 + $0x8] sm:$0xf]
        %v1352 = vld [vmem:[#allocation11 + $0xc] sm:$0xf]
        %v1353 = vld [vmem:[#allocation14] sm:$0x1]
        %v1355 = vlaneseq
        %v1356 = vshrl.u32 %v1355, 7
        %v1357 = vsub.s32 0, %v1356
        %v1358 = vrot.slane %v1353, %v1357
        %v1364 = vunpack.c.l.b16 %v1349
        %v1365 = vunpack.c.l.b16 %v1350
        %v1366 = vunpack.c.l.b16 %v1351
        %v1367 = vunpack.c.l.b16 %v1352
        %v1368 = vpack.c.b16 %v1365, %v1364
        %v1369 = vpack.c.b16 %v1367, %v1366
        %v1373 = vsel %vm795, %v1348, 0
        %1375 = vmatprep.subr.bf16.mxu0 0
        %1376 = vmatpush1.bf16.msra.mxu0 %v1368
        %1377 = vmatprep.subr.bf16.mxu0 0
        %1378 = vmatpush1.bf16.msra.mxu0 %v1369
        %1379 = vmatprep.subr.bf16.mxu0 0
        %1380 = vmatpush1.bf16.msra.mxu0 0
        %1381 = vmatprep.subr.bf16.mxu0 0
        %1382 = vmatpush1.bf16.msra.mxu0 0
        %1383 = vmatprep.subr.bf16.mxu0 0
        %1384 = vmatpush1.bf16.msra.mxu0 0
        %1385 = vmatprep.subr.bf16.mxu0 0
        %1386 = vmatpush1.bf16.msra.mxu0 0
        %1387 = vmatprep.subr.bf16.mxu0 0
        %1388 = vmatpush1.bf16.msra.mxu0 0
        %1389 = vmatprep.subr.bf16.mxu0 0
        %1390 = vmatpush1.bf16.msra.mxu0 0
        %1391 = vmatprep.subr.bf16.mxu0 0
        %1392 = vmatpush1.bf16.msra.mxu0 0
        %1393 = vmatprep.subr.bf16.mxu0 0
        %1394 = vmatpush1.bf16.msra.mxu0 0
        %1395 = vmatprep.subr.bf16.mxu0 0
        %1396 = vmatpush1.bf16.msra.mxu0 0
        %1397 = vmatprep.subr.bf16.mxu0 0
        %1398 = vmatpush1.bf16.msra.mxu0 0
        %1399 = vmatprep.subr.bf16.mxu0 0
        %1400 = vmatpush1.bf16.msra.mxu0 0
        %1401 = vmatprep.subr.bf16.mxu0 0
        %1402 = vmatpush1.bf16.msra.mxu0 0
        %1403 = vmatprep.subr.bf16.mxu0 0
        %1404 = vmatpush1.bf16.msra.mxu0 0
        %1405 = vmatprep.subr.bf16.mxu0 0
        %1406 = vmatpush1.bf16.msra.mxu0 0
        %1407 = vmatprep.mubr.bf16.mxu0 0
        %1408 = vmatmul.mubr.bf16.gmra.mrb[0].mxu0 %v1373
        %v1409 = vpop.f32.mrb[0].mxu0
        %v1410 = vadd.f32 %v1358, %v1409
        %v1411 = vpop.f32.mrb[0].mxu0
        %v1412 = vpop.f32.mrb[0].mxu0
        %v1413 = vpop.f32.mrb[0].mxu0
        %1414 = vdwg.mxu0
        %v1415 = vld [vmem:[%s10] sm:$0x1]
        %v1416 = vld [vmem:[%s11] sm:$0x1]
        %v1417 = vsel %vm795, %v1410, 0.0
        %1418 = vadd.xlane.f32.xlu0 %v1417
        %v1419 = vpop.xlane.xlu0 %1418
        %v1420 = vrcp.pop 32.0
        %v1421 = vmul.f32 %v1419, %v1420
        %v1422 = vmul.f32 %v1410, %v1410
        %v1423 = vsel %vm795, %v1422, 0.0
        %1424 = vadd.xlane.f32.xlu0 %v1423
        %v1425 = vpop.xlane.xlu0 %1424
        %v1426 = vmul.f32 %v1425, %v1420
        %v1427 = vmul.f32 %v1421, %v1421
        %v1428 = vsub.f32 %v1426, %v1427
        %v1429 = vadd.f32 %v1428, 1e-05
        %v1430 = vrsqrt.pop %v1429
        %v1431 = vsub.f32 %v1410, %v1421
        %v1432 = vmul.f32 %v1431, %v1430
        %v1434 = vlaneseq
        %v1435 = vshrl.u32 %v1434, 7
        %v1436 = vsub.s32 0, %v1435
        %v1437 = vrot.slane %v1415, %v1436
        %v1439 = vmul.f32 %v1432, %v1437
        %v1441 = vlaneseq
        %v1442 = vshrl.u32 %v1441, 7
        %v1443 = vsub.s32 0, %v1442
        %v1444 = vrot.slane %v1416, %v1443
        %v1446 = vadd.f32 %v1439, %v1444
        %v1447 = vadd.f32 %v1446, %v770
        %v1448 = vpack.c.bf16 %v1447, %v1447
        %v1449 = vld [vmem:[%s15] sm:$0x1]
        %v1450 = vld [vmem:[%s12] sm:$0xf]
        %v1451 = vld [vmem:[%s12 + $0x4] sm:$0xf]
        %v1452 = vld [vmem:[%s12 + $0x8] sm:$0xf]
        %v1453 = vld [vmem:[%s12 + $0xc] sm:$0xf]
        %v1454 = vld [vmem:[%s13] sm:$0x1]
        %v1456 = vlaneseq
        %v1457 = vshrl.u32 %v1456, 7
        %v1458 = vsub.s32 0, %v1457
        %v1459 = vrot.slane %v1454, %v1458
        %v1465 = vunpack.c.l.b16 %v1450
        %v1466 = vunpack.c.l.b16 %v1451
        %v1467 = vunpack.c.l.b16 %v1452
        %v1468 = vunpack.c.l.b16 %v1453
        %v1469 = vpack.c.b16 %v1466, %v1465
        %v1470 = vpack.c.b16 %v1468, %v1467
        %v1474 = vsel %vm795, %v1448, 0
        %1476 = vmatprep.subr.bf16.mxu0 0
        %1477 = vmatpush1.bf16.msra.mxu0 %v1469
        %1478 = vmatprep.subr.bf16.mxu0 0
        %1479 = vmatpush1.bf16.msra.mxu0 %v1470
        %1480 = vmatprep.subr.bf16.mxu0 0
        %1481 = vmatpush1.bf16.msra.mxu0 0
        %1482 = vmatprep.subr.bf16.mxu0 0
        %1483 = vmatpush1.bf16.msra.mxu0 0
        %1484 = vmatprep.subr.bf16.mxu0 0
        %1485 = vmatpush1.bf16.msra.mxu0 0
        %1486 = vmatprep.subr.bf16.mxu0 0
        %1487 = vmatpush1.bf16.msra.mxu0 0
        %1488 = vmatprep.subr.bf16.mxu0 0
        %1489 = vmatpush1.bf16.msra.mxu0 0
        %1490 = vmatprep.subr.bf16.mxu0 0
        %1491 = vmatpush1.bf16.msra.mxu0 0
        %1492 = vmatprep.subr.bf16.mxu0 0
        %1493 = vmatpush1.bf16.msra.mxu0 0
        %1494 = vmatprep.subr.bf16.mxu0 0
        %1495 = vmatpush1.bf16.msra.mxu0 0
        %1496 = vmatprep.subr.bf16.mxu0 0
        %1497 = vmatpush1.bf16.msra.mxu0 0
        %1498 = vmatprep.subr.bf16.mxu0 0
        %1499 = vmatpush1.bf16.msra.mxu0 0
        %1500 = vmatprep.subr.bf16.mxu0 0
        %1501 = vmatpush1.bf16.msra.mxu0 0
        %1502 = vmatprep.subr.bf16.mxu0 0
        %1503 = vmatpush1.bf16.msra.mxu0 0
        %1504 = vmatprep.subr.bf16.mxu0 0
        %1505 = vmatpush1.bf16.msra.mxu0 0
        %1506 = vmatprep.subr.bf16.mxu0 0
        %1507 = vmatpush1.bf16.msra.mxu0 0
        %1508 = vmatprep.mubr.bf16.mxu0 0
        %1509 = vmatmul.mubr.bf16.gmra.mrb[0].mxu0 %v1474
        %v1510 = vpop.f32.mrb[0].mxu0
        %v1511 = vadd.f32 %v1459, %v1510
        %v1512 = vpop.f32.mrb[0].mxu0
        %v1513 = vpop.f32.mrb[0].mxu0
        %v1514 = vpop.f32.mrb[0].mxu0
        %1515 = vdwg.mxu0
        %v1516 = vmax.f32 %v1511, 0.0
        %v1517 = vpack.c.bf16 %v1516, %v1516
        %v1518 = vld [vmem:[%s14] sm:$0xf]
        %v1519 = vld [vmem:[%s14 + $0x4] sm:$0xf]
        %v1520 = vld [vmem:[%s14 + $0x8] sm:$0xf]
        %v1521 = vld [vmem:[%s14 + $0xc] sm:$0xf]
        %v1522 = vld [vmem:[%s14 + $0x10] sm:$0xf]
        %v1523 = vld [vmem:[%s14 + $0x14] sm:$0xf]
        %v1524 = vld [vmem:[%s14 + $0x18] sm:$0xf]
        %v1525 = vld [vmem:[%s14 + $0x1c] sm:$0xf]
        %v1534 = vunpack.c.l.b16 %v1518
        %v1535 = vunpack.c.l.b16 %v1519
        %v1536 = vunpack.c.l.b16 %v1520
        %v1537 = vunpack.c.l.b16 %v1521
        %v1538 = vunpack.c.l.b16 %v1522
        %v1539 = vunpack.c.l.b16 %v1523
        %v1540 = vunpack.c.l.b16 %v1524
        %v1541 = vunpack.c.l.b16 %v1525
        %v1542 = vpack.c.b16 %v1535, %v1534
        %v1543 = vpack.c.b16 %v1537, %v1536
        %v1544 = vpack.c.b16 %v1539, %v1538
        %v1545 = vpack.c.b16 %v1541, %v1540
        %vm1550 = vcmask 523264
        %v1552 = vsel %vm1550, %v1517, 0
        %1554 = vmatprep.subr.bf16.mxu0 0
        %1555 = vmatpush1.bf16.msra.mxu0 %v1542
        %1556 = vmatprep.subr.bf16.mxu0 0
        %1557 = vmatpush1.bf16.msra.mxu0 %v1543
        %1558 = vmatprep.subr.bf16.mxu0 0
        %1559 = vmatpush1.bf16.msra.mxu0 %v1544
        %1560 = vmatprep.subr.bf16.mxu0 0
        %1561 = vmatpush1.bf16.msra.mxu0 %v1545
        %1562 = vmatprep.subr.bf16.mxu0 0
        %1563 = vmatpush1.bf16.msra.mxu0 0
        %1564 = vmatprep.subr.bf16.mxu0 0
        %1565 = vmatpush1.bf16.msra.mxu0 0
        %1566 = vmatprep.subr.bf16.mxu0 0
        %1567 = vmatpush1.bf16.msra.mxu0 0
        %1568 = vmatprep.subr.bf16.mxu0 0
        %1569 = vmatpush1.bf16.msra.mxu0 0
        %1570 = vmatprep.subr.bf16.mxu0 0
        %1571 = vmatpush1.bf16.msra.mxu0 0
        %1572 = vmatprep.subr.bf16.mxu0 0
        %1573 = vmatpush1.bf16.msra.mxu0 0
        %1574 = vmatprep.subr.bf16.mxu0 0
        %1575 = vmatpush1.bf16.msra.mxu0 0
        %1576 = vmatprep.subr.bf16.mxu0 0
        %1577 = vmatpush1.bf16.msra.mxu0 0
        %1578 = vmatprep.subr.bf16.mxu0 0
        %1579 = vmatpush1.bf16.msra.mxu0 0
        %1580 = vmatprep.subr.bf16.mxu0 0
        %1581 = vmatpush1.bf16.msra.mxu0 0
        %1582 = vmatprep.subr.bf16.mxu0 0
        %1583 = vmatpush1.bf16.msra.mxu0 0
        %1584 = vmatprep.subr.bf16.mxu0 0
        %1585 = vmatpush1.bf16.msra.mxu0 0
        %1586 = vmatprep.mubr.bf16.mxu0 0
        %1587 = vmatmul.mubr.bf16.gmra.mrb[0].mxu0 %v1552
        %v1588 = vpop.f32.mrb[0].mxu0
        %v1589 = vadd.f32 0.0, %v1588
        %v1590 = vpop.f32.mrb[0].mxu0
        %v1591 = vpop.f32.mrb[0].mxu0
        %v1592 = vpop.f32.mrb[0].mxu0
        %1593 = vdwg.mxu0
        %v1595 = vlaneseq
        %v1596 = vshrl.u32 %v1595, 7
        %v1597 = vsub.s32 0, %v1596
        %v1598 = vrot.slane %v1449, %v1597
        %v1600 = vadd.f32 %v1598, %v1589
        %v1601 = vsel %vm795, %v1600, 0.0
        %1602 = vadd.xlane.f32.xlu0 %v1601
        %v1603 = vpop.xlane.xlu0 %1602
        %v1604 = vmul.f32 %v1603, %v1420
        %v1605 = vmul.f32 %v1600, %v1600
        %v1606 = vsel %vm795, %v1605, 0.0
        %1607 = vadd.xlane.f32.xlu0 %v1606
        %v1608 = vpop.xlane.xlu0 %1607
        %v1609 = vmul.f32 %v1608, %v1420
        %v1610 = vmul.f32 %v1604, %v1604
        %v1611 = vsub.f32 %v1609, %v1610
        %v1612 = vadd.f32 %v1611, 1e-05
        %v1613 = vrsqrt.pop %v1612
        %v1614 = vsub.f32 %v1600, %v1604
        %v1615 = vmul.f32 %v1614, %v1613
        %v1616 = vmul.f32 %v1615, %v1437
        %v1617 = vadd.f32 %v1616, %v1444
        %v1618 = vadd.f32 %v1617, %v1600
        %1619 = vst.msk [vmem:[%s616] sm:$0xff] %vm795, %v1618
        %s1620 = sand.u32 %s403, 1
        %s1621 = scalar_lea.sflag [#allocation8], %s1620
        %s1622 = sand.u32 %s403, 1
        %s1623 = smul.addr %s1622, 8
        %s1624 = scalar_lea.vmem [#allocation15], %s1623
        // Predicated region
        $region109: #{tpu_custom_call.1} parent=83 // pred_check
          %p1625 = pneg %p413
        $region110: #{tpu_custom_call.1} parent=83 // pred_check_branch
          %1627 = sbr.rel (%p1625) target = $region112
        $region111: #{tpu_custom_call.1} parent=83 // pred_region
          %s1629 = ssub.s32 128, 128
          %1630 = vsyncadd %s1621, %s1629
          %s1631 = sadd.s32 %s38, %s37
          %s1632 = smul.addr %s1631, 128
          %s1633 = scalar_lea.hbm %s16, %s1632
          %s1635 = sshll.u32 %s1624, 4
          %s1636 = int_to_ptr.vmem [resolvable:$true] %s1635
          %1638 = dma.vmem_to_hbm [thread:$0]  %s1636, 128, %s1633, %s1621
        $region112: #{tpu_custom_call.1} parent=83 // pred_fallthru
          _
      $region84: #{tpu_custom_call.1} parent=5 // pred_fallthru
        _
      %p1639 = scmp.le.s32.totalorder 2, %s28
      // Predicated region
      $region113: #{tpu_custom_call.1} parent=5 // pred_check
        %p1640 = pneg %p1639
      $region114: #{tpu_custom_call.1} parent=5 // pred_check_branch
        %1642 = sbr.rel (%p1640) target = $region116
      $region115: #{tpu_custom_call.1} parent=5 // pred_region
        %s1643 = ssub.s32 %s28, 2
        // Predicated region
        $region117: #{tpu_custom_call.1} parent=115 // pred_check
          %p1644 = pneg %p419
        $region118: #{tpu_custom_call.1} parent=115 // pred_check_branch
          %1646 = sbr.rel (%p1644) target = $region120
        $region119: #{tpu_custom_call.1} parent=115 // pred_region
          %s1647 = sand.u32 %s404, 1
          %s1648 = scalar_lea.sflag [#allocation8], %s1647
          %s1649 = sand.u32 %s404, 1
          %s1650 = smul.addr %s1649, 8
          %s1651 = scalar_lea.vmem [#allocation15], %s1650
          %1652 = dma.done %s1648, 128
        $region120: #{tpu_custom_call.1} parent=115 // pred_fallthru
          _
      $region116: #{tpu_custom_call.1} parent=5 // pred_fallthru
        _
    $region6: #{tpu_custom_call.1} parent=1 // loop_footer
      %s32 = sadd.s32 1, %s28
    $region7: #{tpu_custom_call.1} parent=1 // loop_footer_branch
      %27 = sbr.rel target = $region3
    $region8: #{tpu_custom_call.1} parent=1 // loop_exit
      _
    %1653 = vsyncpa [#allocation7], 1
    %s1654 = scalar_lea.sflag [#allocation7], 1
    %1655 = vsyncpa %s1654, 1
    %1656 = vsyncpa [#allocation10], 1
    %1657 = vsyncpa [#allocation13], 1
    %1658 = vsyncpa [#allocation8], 1
    %s1659 = scalar_lea.sflag [#allocation8], 1
    %1660 = vsyncpa %s1659, 1

</llo_original>
